<compile_context>
chip_gen: v6e
topology: v6e:2x2x1
jax: 0.10.0
libtpu: 0.0.40
codegen_flags: <defaults>
</compile_context>

<pallas_src>
import functools

import jax
import jax.numpy as jnp
from jax.experimental import pallas as pl
from jax.experimental.pallas import tpu as pltpu

LN_EPS = 1e-5
LEAKY_SLOPE = 0.01   # nn.LeakyReLU default negative_slope
HIDDEN = 200         # hidden_sizes=[200]
N_OUT = 2
LANES = 128
ROW_ALIGN = 16       # sublane alignment for batch tiles (safe for bf16 packing too)


def _round_up(n, m):
    return ((n + m - 1) // m) * m


def _leaky_relu(x):
    return jnp.where(x >= 0, x, LEAKY_SLOPE * x)


# -----------------------------------------------------------------------------
# Kernel: one batch tile [TB, D] -> [TB, 128] bf16 (first 2 lanes are real output)
# -----------------------------------------------------------------------------
def fc2_kernel(x_ref, w1_ref, b1_ref, w2_ref, b2_ref, o_ref, *, hidden):
    # x streams in its storage dtype (bf16 preferred); all LN math in f32.
    x = x_ref[...].astype(jnp.float32)                       # [TB, D]

    # --- LayerNorm-1 (gamma/beta folded into w1/b1), one-pass stats, clamped var ---
    mu1 = jnp.mean(x, axis=-1, keepdims=True)
    var1 = jnp.maximum(jnp.mean(x * x, axis=-1, keepdims=True) - mu1 * mu1, 0.0)
    xn1 = (x - mu1) * jax.lax.rsqrt(var1 + LN_EPS)

    # --- Linear-1 on the MXU (bf16 operands, f32 accumulation) + LeakyReLU ---
    h = jnp.dot(xn1.astype(jnp.bfloat16), w1_ref[...],
                preferred_element_type=jnp.float32) + b1_ref[...]
    h = _leaky_relu(h)                                       # [TB, HP]

    # --- LayerNorm-2 over the *real* `hidden` features ---
    # INVARIANT (required for correctness, do not break when editing):
    #   * b1 padded lanes are zero and LeakyReLU(0) == 0  =>  h[:, hidden:] == 0,
    #     so plain sums over HP lanes equal sums over the first `hidden` lanes.
    #   * w2 padded rows are zero  =>  the garbage normalized values living in the
    #     padded lanes of hn contribute nothing to the layer-2 matmul.
    inv_h = 1.0 / hidden
    mu2 = jnp.sum(h, axis=-1, keepdims=True) * inv_h
    var2 = jnp.maximum(jnp.sum(h * h, axis=-1, keepdims=True) * inv_h - mu2 * mu2, 0.0)
    hn = (h - mu2) * jax.lax.rsqrt(var2 + LN_EPS)

    # --- Linear-2 + LeakyReLU, lane-dense (128-wide) bf16 store ---
    o = jnp.dot(hn, w2_ref[...], preferred_element_type=jnp.float32) + b2_ref[...]
    o_ref[...] = _leaky_relu(o).astype(o_ref.dtype)


# -----------------------------------------------------------------------------
# Parameter preprocessing: fold LN affine into the Linear, pad to lane widths.
# -----------------------------------------------------------------------------
def _fold_and_pad_params(params, hidden, hp, np_out):
    g1, be1, w1, b1, g2, be2, w2, b2 = params
    D = w1.shape[0]
    # (xn * g + be) @ W + b  ==  xn @ (g.T * W) + (be @ W + b)
    w1f = g1.reshape(D, 1) * w1                       # [D, hidden]
    b1f = b1 + be1 @ w1                               # [1, hidden]
    w2f = g2.reshape(hidden, 1) * w2                  # [hidden, 2]
    b2f = b2 + be2 @ w2                               # [1, 2]
    # Lane-align: hidden -> hp (256), out 2 -> np_out (128); padding MUST stay zero
    # (LayerNorm-2 invariant in the kernel relies on it).
    w1p = jnp.zeros((D, hp), jnp.float32).at[:, :hidden].set(w1f).astype(jnp.bfloat16)
    b1p = jnp.zeros((1, hp), jnp.float32).at[:, :hidden].set(b1f)
    w2p = jnp.zeros((hp, np_out), jnp.float32).at[:hidden, :N_OUT].set(w2f)
    b2p = jnp.zeros((1, np_out), jnp.float32).at[:, :N_OUT].set(b2f)
    return w1p, b1p, w2p, b2p


# -----------------------------------------------------------------------------
# Wrapper
# -----------------------------------------------------------------------------
def fc2_forward(x, params, *, hidden=HIDDEN, vmem_budget=32 * 1024 * 1024, tb_cap=1024):
    """x: [B, C, H, W] (or any [B, ...]) in f32 or bf16; returns [B, 2] float32."""
    B = x.shape[0]
    x2d = x.reshape(B, -1)
    # Stream x in its native floating dtype: bf16 inputs halve the dominant HBM read.
    # (No wrapper-side cast: that would add a full extra HBM pass over x.)
    if x2d.dtype not in (jnp.float32, jnp.bfloat16):
        x2d = x2d.astype(jnp.float32)
    D = x2d.shape[1]
    x_bytes = jnp.dtype(x2d.dtype).itemsize

    HP = _round_up(hidden, LANES)     # 200 -> 256
    NP = LANES                        # 2 -> 128 (lane-dense output store)

    w1p, b1p, w2p, b2p = _fold_and_pad_params(params, hidden, HP, NP)

    # ---- derive TB from the VMEM budget (streamed x buffers + f32 temporaries) ----
    n_xbuf = 3                                              # Buffered(3) on x
    per_row = (D * (n_xbuf * x_bytes + 4 + 2)               # x buffers + x_f32 + xn1_bf16
               + HP * 4 * 4                                 # h / hn / misc f32 temporaries
               + NP * (4 + 2 * 2))                          # o f32 + double-buffered bf16 out
    resident = 2 * (D * HP * 2 + (HP + HP * NP + NP) * 4)   # double-buffered weights/biases
    avail = vmem_budget - resident - (2 << 20)              # 2 MiB slack
    tb_budget = max(ROW_ALIGN, (max(avail, 0) // per_row) // ROW_ALIGN * ROW_ALIGN)

    TB = min(tb_cap, tb_budget, _round_up(B, ROW_ALIGN))
    # v7x megacore: guarantee >= 2 grid steps (2 TensorCores) once B is large enough
    # that halving the tile does not hurt HBM-roofline utilization.
    if B >= 256:
        TB = min(TB, _round_up(pl.cdiv(B, 2), ROW_ALIGN))

    num_steps = pl.cdiv(B, TB)
    grid = (num_steps,)

    # Streamed x tile: 3-deep pipeline when the grid is deep enough (guarded for
    # older jax versions that lack pl.Buffered / pipeline_mode).
    x_index_map = lambda i: (i, 0)
    x_spec = pl.BlockSpec((TB, D), x_index_map)
    if num_steps >= 3 and hasattr(pl, "Buffered"):
        try:
            x_spec = pl.BlockSpec((TB, D), x_index_map, pipeline_mode=pl.Buffered(3))
        except TypeError:
            x_spec = pl.BlockSpec((TB, D), x_index_map)

    flops = 2 * B * D * HP + 2 * B * HP * NP
    bytes_accessed = (B * D * x_bytes                       # x stream
                      + w1p.size * 2                        # bf16 weights
                      + (b1p.size + w2p.size + b2p.size) * 4
                      + B * NP * 2)                         # bf16 output

    out = pl.pallas_call(
        functools.partial(fc2_kernel, hidden=hidden),
        out_shape=jax.ShapeDtypeStruct((B, NP), jnp.bfloat16),
        grid_spec=pltpu.PrefetchScalarGridSpec(
            num_scalar_prefetch=0,
            grid=grid,
            in_specs=[
                x_spec,                                      # streamed batch tile
                pl.BlockSpec((D, HP), lambda i: (0, 0)),     # resident weights
                pl.BlockSpec((1, HP), lambda i: (0, 0)),
                pl.BlockSpec((HP, NP), lambda i: (0, 0)),
                pl.BlockSpec((1, NP), lambda i: (0, 0)),
            ],
            out_specs=pl.BlockSpec((TB, NP), lambda i: (i, 0)),
        ),
        compiler_params=pltpu.CompilerParams(
            dimension_semantics=("parallel",),
            vmem_limit_bytes=vmem_budget,
        ),
        cost_estimate=pl.CostEstimate(
            flops=flops, transcendentals=2 * B, bytes_accessed=bytes_accessed),
    )(x2d, w1p, b1p, w2p, b2p)

    return out[:, :N_OUT].astype(jnp.float32)


# -----------------------------------------------------------------------------
# Parameter init + pure-JAX reference (PyTorch semantics, full f32)
# -----------------------------------------------------------------------------
def init_params(key, d_in, hidden=HIDDEN):
    """Shapes follow Fc2.__init__ with hidden_sizes=[200]:
    LN(D), Linear(D,200), LN(200), Linear(200,2). Linear weights stored [in, out]."""
    D = 1
    for s in d_in:
        D *= int(s)
    ks = jax.random.split(key, 6)
    g1 = (1.0 + 0.01 * jax.random.normal(ks[0], (1, D))).astype(jnp.float32)
    be1 = (0.01 * jax.random.normal(ks[1], (1, D))).astype(jnp.float32)
    g2 = (1.0 + 0.01 * jax.random.normal(ks[2], (1, hidden))).astype(jnp.float32)
    be2 = (0.01 * jax.random.normal(ks[3], (1, hidden))).astype(jnp.float32)
    w1 = (jax.random.normal(ks[4], (D, hidden)) / jnp.sqrt(D)).astype(jnp.float32)
    b1 = jnp.zeros((1, hidden), jnp.float32)
    w2 = (jax.random.normal(ks[5], (hidden, 2)) / jnp.sqrt(hidden)).astype(jnp.float32)
    b2 = jnp.zeros((1, 2), jnp.float32)
    return (g1, be1, w1, b1, g2, be2, w2, b2)


def _layer_norm_ref(x, gamma, beta):
    mu = jnp.mean(x, axis=-1, keepdims=True)
    var = jnp.mean((x - mu) * (x - mu), axis=-1, keepdims=True)
    return (x - mu) * jax.lax.rsqrt(var + LN_EPS) * gamma + beta


def fc2_reference(x, params):
    (g1, be1, w1, b1, g2, be2, w2, b2) = params
    h = x.reshape(x.shape[0], -1).astype(jnp.float32)
    h = _layer_norm_ref(h, g1, be1)
    h = _leaky_relu(h @ w1 + b1)
    h = _layer_norm_ref(h, g2, be2)
    return _leaky_relu(h @ w2 + b2)


if __name__ == "__main__":
    key = jax.random.PRNGKey(0)
    k_x, k_p = jax.random.split(key)

    B, C, H, W = 2, 4, 16, 16          # d_in = (4, 16, 16) -> D = 1024
    x = jax.random.normal(k_x, (B, C, H, W), dtype=jnp.float32)
    params = init_params(k_p, (C, H, W), hidden=HIDDEN)

    # Performance path: upstream keeps activations in bf16; kernel upcasts internally.
    x_bf16 = x.astype(jnp.bfloat16)
    out = jax.block_until_ready(fc2_forward(x_bf16, params))
    ref = fc2_reference(x_bf16, params)   # same quantized input through f32 reference
    assert out.shape == (B, N_OUT), out.shape
    # bf16 MXU operands (f32 accumulation) + bf16 output store => few e-3 abs error.
    assert jnp.allclose(out, ref, atol=3e-2, rtol=3e-2), "bf16-x mismatch vs reference"

    # f32 inputs also stream directly (no wrapper-side cast, same kernel).
    out32 = jax.block_until_ready(fc2_forward(x, params))
    ref32 = fc2_reference(x, params)
    assert jnp.allclose(out32, ref32, atol=3e-2, rtol=3e-2), "f32-x mismatch vs reference"

    print("KERNEL_OK")
</pallas_src>

<mosaic_0001>
module attributes {stable_mosaic.version = 11 : i64} {
  func.func @fc2_kernel(%arg0: i32, %arg1: memref<16x1024xbf16, #tpu.memory_space<vmem>>, %arg2: memref<1024x256xbf16, #tpu.memory_space<vmem>>, %arg3: memref<1x256xf32, #tpu.memory_space<vmem>>, %arg4: memref<256x128xf32, #tpu.memory_space<vmem>>, %arg5: memref<1x128xf32, #tpu.memory_space<vmem>>, %arg6: memref<16x128xbf16, #tpu.memory_space<vmem>>) attributes {dimension_semantics = [#tpu.dimension_semantics<parallel>], iteration_bounds = array<i64: 1>, scalar_prefetch = 0 : i64, scratch_operands = 0 : i64, tpu.core_type = #tpu.core_type<tc>, window_params = [{transform_indices = @transform_0, window_bounds = array<i64: 16, 1024>}, {pipeline_mode = #tpu.pipeline_mode<synchronous>, transform_indices = @transform_1, window_bounds = array<i64: 1024, 256>}, {pipeline_mode = #tpu.pipeline_mode<synchronous>, transform_indices = @transform_2, window_bounds = array<i64: 1, 256>}, {pipeline_mode = #tpu.pipeline_mode<synchronous>, transform_indices = @transform_3, window_bounds = array<i64: 256, 128>}, {pipeline_mode = #tpu.pipeline_mode<synchronous>, transform_indices = @transform_4, window_bounds = array<i64: 1, 128>}, {transform_indices = @transform_5, window_bounds = array<i64: 16, 128>}]} {
    %c0 = arith.constant 0 : index
    %c0_0 = arith.constant 0 : index
    %0 = vector.load %arg1[%c0, %c0_0] : memref<16x1024xbf16, #tpu.memory_space<vmem>>, vector<16x1024xbf16>
    %1 = arith.extf %0 : vector<16x1024xbf16> to vector<16x1024xf32>
    %cst = arith.constant dense<0.000000e+00> : vector<16xf32>
    %2 = vector.multi_reduction <add>, %1, %cst [1] : vector<16x1024xf32> to vector<16xf32>
    %3 = vector.shape_cast %2 : vector<16xf32> to vector<16x1xf32>
    %cst_1 = arith.constant 1.024000e+03 : f32
    %4 = vector.broadcast %cst_1 : f32 to vector<16x1xf32>
    %5 = arith.divf %3, %4 : vector<16x1xf32>
    %6 = arith.mulf %1, %1 : vector<16x1024xf32>
    %cst_2 = arith.constant dense<0.000000e+00> : vector<16xf32>
    %7 = vector.multi_reduction <add>, %6, %cst_2 [1] : vector<16x1024xf32> to vector<16xf32>
    %8 = vector.shape_cast %7 : vector<16xf32> to vector<16x1xf32>
    %cst_3 = arith.constant 1.024000e+03 : f32
    %9 = vector.broadcast %cst_3 : f32 to vector<16x1xf32>
    %10 = arith.divf %8, %9 : vector<16x1xf32>
    %11 = arith.mulf %5, %5 : vector<16x1xf32>
    %12 = arith.subf %10, %11 : vector<16x1xf32>
    %cst_4 = arith.constant 0.000000e+00 : f32
    %13 = vector.broadcast %cst_4 : f32 to vector<16x1xf32>
    %14 = arith.maximumf %12, %13 : vector<16x1xf32>
    %15 = vector.broadcast %5 : vector<16x1xf32> to vector<16x1024xf32>
    %16 = arith.subf %1, %15 : vector<16x1024xf32>
    %cst_5 = arith.constant 9.99999974E-6 : f32
    %17 = vector.broadcast %cst_5 : f32 to vector<16x1xf32>
    %18 = arith.addf %14, %17 : vector<16x1xf32>
    %19 = math.rsqrt %18 : vector<16x1xf32>
    %20 = vector.broadcast %19 : vector<16x1xf32> to vector<16x1024xf32>
    %21 = arith.mulf %16, %20 : vector<16x1024xf32>
    %22 = arith.truncf %21 : vector<16x1024xf32> to vector<16x1024xbf16>
    %c0_6 = arith.constant 0 : index
    %c0_7 = arith.constant 0 : index
    %23 = vector.load %arg2[%c0_6, %c0_7] : memref<1024x256xbf16, #tpu.memory_space<vmem>>, vector<1024x256xbf16>
    %cst_8 = arith.constant dense<0.000000e+00> : vector<16x256xf32>
    %24 = tpu.matmul %22, %23, %cst_8 {dimension_numbers = #tpu.dot_dimension_numbers<[1], [0], [0], [1], [0, 0, 1, 1], [], []>} : vector<16x1024xbf16>, vector<1024x256xbf16>, vector<16x256xf32> -> vector<16x256xf32>
    %c0_9 = arith.constant 0 : index
    %c0_10 = arith.constant 0 : index
    %25 = vector.load %arg3[%c0_9, %c0_10] : memref<1x256xf32, #tpu.memory_space<vmem>>, vector<1x256xf32>
    %26 = vector.broadcast %25 : vector<1x256xf32> to vector<16x256xf32>
    %27 = arith.addf %24, %26 : vector<16x256xf32>
    %cst_11 = arith.constant 0.000000e+00 : f32
    %28 = vector.broadcast %cst_11 : f32 to vector<16x256xf32>
    %29 = arith.cmpf oge, %27, %28 : vector<16x256xf32>
    %cst_12 = arith.constant 0.00999999977 : f32
    %30 = vector.broadcast %cst_12 : f32 to vector<16x256xf32>
    %31 = arith.mulf %30, %27 : vector<16x256xf32>
    %32 = arith.select %29, %27, %31 : vector<16x256xi1>, vector<16x256xf32>
    %cst_13 = arith.constant dense<0.000000e+00> : vector<16xf32>
    %33 = vector.multi_reduction <add>, %32, %cst_13 [1] : vector<16x256xf32> to vector<16xf32>
    %34 = vector.shape_cast %33 : vector<16xf32> to vector<16x1xf32>
    %cst_14 = arith.constant 5.000000e-03 : f32
    %35 = vector.broadcast %cst_14 : f32 to vector<16x1xf32>
    %36 = arith.mulf %34, %35 : vector<16x1xf32>
    %37 = arith.mulf %32, %32 : vector<16x256xf32>
    %cst_15 = arith.constant dense<0.000000e+00> : vector<16xf32>
    %38 = vector.multi_reduction <add>, %37, %cst_15 [1] : vector<16x256xf32> to vector<16xf32>
    %39 = vector.shape_cast %38 : vector<16xf32> to vector<16x1xf32>
    %cst_16 = arith.constant 5.000000e-03 : f32
    %40 = vector.broadcast %cst_16 : f32 to vector<16x1xf32>
    %41 = arith.mulf %39, %40 : vector<16x1xf32>
    %42 = arith.mulf %36, %36 : vector<16x1xf32>
    %43 = arith.subf %41, %42 : vector<16x1xf32>
    %cst_17 = arith.constant 0.000000e+00 : f32
    %44 = vector.broadcast %cst_17 : f32 to vector<16x1xf32>
    %45 = arith.maximumf %43, %44 : vector<16x1xf32>
    %46 = vector.broadcast %36 : vector<16x1xf32> to vector<16x256xf32>
    %47 = arith.subf %32, %46 : vector<16x256xf32>
    %cst_18 = arith.constant 9.99999974E-6 : f32
    %48 = vector.broadcast %cst_18 : f32 to vector<16x1xf32>
    %49 = arith.addf %45, %48 : vector<16x1xf32>
    %50 = math.rsqrt %49 : vector<16x1xf32>
    %51 = vector.broadcast %50 : vector<16x1xf32> to vector<16x256xf32>
    %52 = arith.mulf %47, %51 : vector<16x256xf32>
    %c0_19 = arith.constant 0 : index
    %c0_20 = arith.constant 0 : index
    %53 = vector.load %arg4[%c0_19, %c0_20] : memref<256x128xf32, #tpu.memory_space<vmem>>, vector<256x128xf32>
    %cst_21 = arith.constant dense<0.000000e+00> : vector<16x128xf32>
    %54 = tpu.matmul %52, %53, %cst_21 {dimension_numbers = #tpu.dot_dimension_numbers<[1], [0], [0], [1], [0, 0, 1, 1], [], []>} : vector<16x256xf32>, vector<256x128xf32>, vector<16x128xf32> -> vector<16x128xf32>
    %c0_22 = arith.constant 0 : index
    %c0_23 = arith.constant 0 : index
    %55 = vector.load %arg5[%c0_22, %c0_23] : memref<1x128xf32, #tpu.memory_space<vmem>>, vector<1x128xf32>
    %56 = vector.broadcast %55 : vector<1x128xf32> to vector<16x128xf32>
    %57 = arith.addf %54, %56 : vector<16x128xf32>
    %cst_24 = arith.constant 0.000000e+00 : f32
    %58 = vector.broadcast %cst_24 : f32 to vector<16x128xf32>
    %59 = arith.cmpf oge, %57, %58 : vector<16x128xf32>
    %cst_25 = arith.constant 0.00999999977 : f32
    %60 = vector.broadcast %cst_25 : f32 to vector<16x128xf32>
    %61 = arith.mulf %60, %57 : vector<16x128xf32>
    %62 = arith.select %59, %57, %61 : vector<16x128xi1>, vector<16x128xf32>
    %63 = arith.truncf %62 : vector<16x128xf32> to vector<16x128xbf16>
    %c0_26 = arith.constant 0 : index
    %c0_27 = arith.constant 0 : index
    %64 = vector.load %arg6[%c0_26, %c0_27] : memref<16x128xbf16, #tpu.memory_space<vmem>>, vector<16x128xbf16>
    tpu.vector_store %arg6[%c0_26, %c0_27], %63 {strides = array<i32>} : memref<16x128xbf16, #tpu.memory_space<vmem>>, vector<16x128xbf16>,
    return
  }
  func.func @transform_0(%arg0: i32) -> (i32, i32) {
    %c0_i32 = arith.constant 0 : i32
    %c0_i32_0 = arith.constant 0 : i32
    return %arg0, %c0_i32 : i32, i32
  }
  func.func @transform_1(%arg0: i32) -> (i32, i32) {
    %c0_i32 = arith.constant 0 : i32
    %c0_i32_0 = arith.constant 0 : i32
    %c0_i32_1 = arith.constant 0 : i32
    return %c0_i32, %c0_i32_0 : i32, i32
  }
  func.func @transform_2(%arg0: i32) -> (i32, i32) {
    %c0_i32 = arith.constant 0 : i32
    %c0_i32_0 = arith.constant 0 : i32
    %c0_i32_1 = arith.constant 0 : i32
    return %c0_i32, %c0_i32_0 : i32, i32
  }
  func.func @transform_3(%arg0: i32) -> (i32, i32) {
    %c0_i32 = arith.constant 0 : i32
    %c0_i32_0 = arith.constant 0 : i32
    %c0_i32_1 = arith.constant 0 : i32
    return %c0_i32, %c0_i32_0 : i32, i32
  }
  func.func @transform_4(%arg0: i32) -> (i32, i32) {
    %c0_i32 = arith.constant 0 : i32
    %c0_i32_0 = arith.constant 0 : i32
    %c0_i32_1 = arith.constant 0 : i32
    return %c0_i32, %c0_i32_0 : i32, i32
  }
  func.func @transform_5(%arg0: i32) -> (i32, i32) {
    %c0_i32 = arith.constant 0 : i32
    %c0_i32_0 = arith.constant 0 : i32
    return %arg0, %c0_i32 : i32, i32
  }
}

</mosaic_0001>

<llo_original>
// kernel: tpu_custom_call.1
$region0: #{tpu_custom_call.1}
  #allocation0 [shape = 'u32[]', space=smem, size = 0x4, offset = 0x4, fixed_abs, tag = 'smem constant byte address 0x4 - core index']
  #allocation1 [shape = 'u32[144,128]{1,0:T(1,128)}', space=vmem, size = 0x12000, scoped, tag = 'internal scratch']
  %s0 = inlined_call_operand.hbm [shape: bf16[2,1024], index: 0, kind: input, shape index: {}]
  %s1 = inlined_call_operand.hbm [shape: bf16[1024,256], index: 1, kind: input, shape index: {}]
  %s2 = inlined_call_operand.vmem [shape: f32[1,256], index: 2, kind: input, shape index: {}]
  %s3 = inlined_call_operand.hbm [shape: f32[256,128], index: 3, kind: input, shape index: {}]
  %s4 = inlined_call_operand.vmem [shape: f32[1,128], index: 4, kind: input, shape index: {}]
  %s5 = inlined_call_operand.hbm [shape: bf16[2,128], index: 5, kind: output, shape index: {}]
  %s6 = sld [smem:[#allocation0]]
  $region42: #{tpu_custom_call.1} parent=0
    _
  %s8 = ssub.s32 1, %s6
  %s9 = scalar_select 0, %s8, %s6
  $region1: #{tpu_custom_call.1} parent=0
    #allocation2 [shape = 'u8[32768]{0}', space=vmem, size = 0x8000, scoped, tag = 'input window, operand 0, single buffered']
    #allocation3 [shape = 's32[1]{0}', space=sflag, size = 0x4, scoped, tag = 'scoped memory for tpu_custom_call.1']
    #allocation4 [shape = 's32[1]{0}', space=sflag, size = 0x4, scoped, tag = 'scoped memory for tpu_custom_call.1']
    #allocation5 [shape = 'u8[524288]{0}', space=vmem, size = 0x80000, scoped, tag = 'input window, operand 1, single buffered']
    #allocation6 [shape = 's32[1]{0}', space=sflag, size = 0x4, scoped, tag = 'scoped memory for tpu_custom_call.1']
    #allocation7 [shape = 'u8[131072]{0}', space=vmem, size = 0x20000, scoped, tag = 'input window, operand 3, single buffered']
    #allocation8 [shape = 'u8[4096]{0}', space=vmem, size = 0x1000, scoped, tag = 'output window, operand 0, single buffered']
    %10 = vsyncpa [#allocation3], 0
    %11 = vsyncpa [#allocation6], 0
    %12 = vsyncpa [#allocation4], 0
    // Predicated region
    $region2: #{tpu_custom_call.1} parent=1 // pred_check
      _
    $region3: #{tpu_custom_call.1} parent=1 // pred_check_branch
      %14 = sbr.rel (0) target = $region5
    $region4: #{tpu_custom_call.1} parent=1 // pred_region
      %s16 = ssub.s32 1024, 128
      %17 = vsyncadd [#allocation3], %s16
      %s18 = sshll.u32 [#allocation2], 4
      %s19 = int_to_ptr.vmem [resolvable:$true] %s18
      %24 = dma.hbm_to_vmem [thread:$0]  %s0, 128, %s19, [#allocation3], 128, 128, 8
    $region5: #{tpu_custom_call.1} parent=1 // pred_fallthru
      _
    // Predicated region
    $region6: #{tpu_custom_call.1} parent=1 // pred_check
      _
    $region7: #{tpu_custom_call.1} parent=1 // pred_check_branch
      %26 = sbr.rel (0) target = $region9
    $region8: #{tpu_custom_call.1} parent=1 // pred_region
      %s28 = ssub.s32 16384, 16384
      %29 = vsyncadd [#allocation6], %s28
      %s30 = sshll.u32 [#allocation5], 4
      %s31 = int_to_ptr.vmem [resolvable:$true] %s30
      %36 = dma.hbm_to_vmem [thread:$0]  %s1, 16384, %s31, [#allocation6], 128, 128, 8
    $region9: #{tpu_custom_call.1} parent=1 // pred_fallthru
      _
    // Predicated region
    $region10: #{tpu_custom_call.1} parent=1 // pred_check
      _
    $region11: #{tpu_custom_call.1} parent=1 // pred_check_branch
      %38 = sbr.rel (0) target = $region13
    $region12: #{tpu_custom_call.1} parent=1 // pred_region
      _
    $region13: #{tpu_custom_call.1} parent=1 // pred_fallthru
      _
    // Predicated region
    $region14: #{tpu_custom_call.1} parent=1 // pred_check
      _
    $region15: #{tpu_custom_call.1} parent=1 // pred_check_branch
      %40 = sbr.rel (0) target = $region17
    $region16: #{tpu_custom_call.1} parent=1 // pred_region
      %s42 = ssub.s32 4096, 4096
      %43 = vsyncadd [#allocation6], %s42
      %s44 = sshll.u32 [#allocation7], 4
      %s45 = int_to_ptr.vmem [resolvable:$true] %s44
      %50 = dma.hbm_to_vmem [thread:$0]  %s3, 4096, %s45, [#allocation6], 128, 128, 8
    $region17: #{tpu_custom_call.1} parent=1 // pred_fallthru
      _
    // Predicated region
    $region18: #{tpu_custom_call.1} parent=1 // pred_check
      _
    $region19: #{tpu_custom_call.1} parent=1 // pred_check_branch
      %52 = sbr.rel (0) target = $region21
    $region20: #{tpu_custom_call.1} parent=1 // pred_region
      _
    $region21: #{tpu_custom_call.1} parent=1 // pred_fallthru
      _
    // Predicated region
    $region22: #{tpu_custom_call.1} parent=1 // pred_check
      _
    $region23: #{tpu_custom_call.1} parent=1 // pred_check_branch
      %54 = sbr.rel (0) target = $region25
    $region24: #{tpu_custom_call.1} parent=1 // pred_region
      %55 = dma.done [#allocation3], 1024
    $region25: #{tpu_custom_call.1} parent=1 // pred_fallthru
      _
    // Predicated region
    $region26: #{tpu_custom_call.1} parent=1 // pred_check
      _
    $region27: #{tpu_custom_call.1} parent=1 // pred_check_branch
      %57 = sbr.rel (0) target = $region29
    $region28: #{tpu_custom_call.1} parent=1 // pred_region
      %58 = dma.done [#allocation6], 16384
    $region29: #{tpu_custom_call.1} parent=1 // pred_fallthru
      _
    // Predicated region
    $region30: #{tpu_custom_call.1} parent=1 // pred_check
      _
    $region31: #{tpu_custom_call.1} parent=1 // pred_check_branch
      %60 = sbr.rel (0) target = $region33
    $region32: #{tpu_custom_call.1} parent=1 // pred_region
      %61 = dma.done [#allocation6], 4096
    $region33: #{tpu_custom_call.1} parent=1 // pred_fallthru
      _
    %v62 = vld [vmem:[#allocation2] sm:$0xff]
    %v63 = vld [vmem:[#allocation2 + $0x8] sm:$0xff]
    %v64 = vld [vmem:[#allocation2 + $0x10] sm:$0xff]
    %v65 = vld [vmem:[#allocation2 + $0x18] sm:$0xff]
    %v66 = vld [vmem:[#allocation2 + $0x20] sm:$0xff]
    %v67 = vld [vmem:[#allocation2 + $0x28] sm:$0xff]
    %v68 = vld [vmem:[#allocation2 + $0x30] sm:$0xff]
    %v69 = vld [vmem:[#allocation2 + $0x38] sm:$0xff]
    %v70 = vunpack.c.l.bf16 %v62
    %v71 = vunpack.c.h.bf16 %v62
    %v72 = vunpack.c.l.bf16 %v63
    %v73 = vunpack.c.h.bf16 %v63
    %v74 = vunpack.c.l.bf16 %v64
    %v75 = vunpack.c.h.bf16 %v64
    %v76 = vunpack.c.l.bf16 %v65
    %v77 = vunpack.c.h.bf16 %v65
    %v78 = vunpack.c.l.bf16 %v66
    %v79 = vunpack.c.h.bf16 %v66
    %v80 = vunpack.c.l.bf16 %v67
    %v81 = vunpack.c.h.bf16 %v67
    %v82 = vunpack.c.l.bf16 %v68
    %v83 = vunpack.c.h.bf16 %v68
    %v84 = vunpack.c.l.bf16 %v69
    %v85 = vunpack.c.h.bf16 %v69
    %v102 = vcombine.low %v70, %v72
    %v103 = vcombine.high %v70, %v72
    %v104 = vcombine.low %v74, %v76
    %v105 = vcombine.high %v74, %v76
    %v107 = vunpack.c.l.s4 1983009808
    %v108 = vunpack.c.0.s8 %v107
    %v109 = vlaneseq
    %v110 = vshrl.u32 %v109, 7
    %v111 = vsub.s32 %v108, %v110
    %v112 = vrot.slane %v102, %v111
    %v114 = vunpack.c.l.s4 1983009808
    %v115 = vunpack.c.0.s8 %v114
    %v116 = vlaneseq
    %v117 = vshrl.u32 %v116, 7
    %v118 = vsub.s32 %v115, %v117
    %v119 = vrot.slane %v103, %v118
    %v121 = vunpack.c.l.s4 1983009808
    %v122 = vunpack.c.0.s8 %v121
    %v123 = vlaneseq
    %v124 = vshrl.u32 %v123, 7
    %v125 = vsub.s32 %v122, %v124
    %v126 = vrot.slane %v104, %v125
    %v128 = vunpack.c.l.s4 1983009808
    %v129 = vunpack.c.0.s8 %v128
    %v130 = vlaneseq
    %v131 = vshrl.u32 %v130, 7
    %v132 = vsub.s32 %v129, %v131
    %v133 = vrot.slane %v105, %v132
    %v134 = vcombine.low %v112, %v126
    %v135 = vcombine.high %v112, %v126
    %v136 = vcombine.low %v119, %v133
    %v137 = vcombine.high %v119, %v133
    %v138 = vcombine.low %v71, %v73
    %v139 = vcombine.high %v71, %v73
    %v140 = vcombine.low %v75, %v77
    %v141 = vcombine.high %v75, %v77
    %v143 = vunpack.c.l.s4 1983009808
    %v144 = vunpack.c.0.s8 %v143
    %v145 = vlaneseq
    %v146 = vshrl.u32 %v145, 7
    %v147 = vsub.s32 %v144, %v146
    %v148 = vrot.slane %v138, %v147
    %v150 = vunpack.c.l.s4 1983009808
    %v151 = vunpack.c.0.s8 %v150
    %v152 = vlaneseq
    %v153 = vshrl.u32 %v152, 7
    %v154 = vsub.s32 %v151, %v153
    %v155 = vrot.slane %v139, %v154
    %v157 = vunpack.c.l.s4 1983009808
    %v158 = vunpack.c.0.s8 %v157
    %v159 = vlaneseq
    %v160 = vshrl.u32 %v159, 7
    %v161 = vsub.s32 %v158, %v160
    %v162 = vrot.slane %v140, %v161
    %v164 = vunpack.c.l.s4 1983009808
    %v165 = vunpack.c.0.s8 %v164
    %v166 = vlaneseq
    %v167 = vshrl.u32 %v166, 7
    %v168 = vsub.s32 %v165, %v167
    %v169 = vrot.slane %v141, %v168
    %v170 = vcombine.low %v148, %v162
    %v171 = vcombine.high %v148, %v162
    %v172 = vcombine.low %v155, %v169
    %v173 = vcombine.high %v155, %v169
    %v174 = vcombine.low %v78, %v80
    %v175 = vcombine.high %v78, %v80
    %v176 = vcombine.low %v82, %v84
    %v177 = vcombine.high %v82, %v84
    %v179 = vunpack.c.l.s4 1983009808
    %v180 = vunpack.c.0.s8 %v179
    %v181 = vlaneseq
    %v182 = vshrl.u32 %v181, 7
    %v183 = vsub.s32 %v180, %v182
    %v184 = vrot.slane %v174, %v183
    %v186 = vunpack.c.l.s4 1983009808
    %v187 = vunpack.c.0.s8 %v186
    %v188 = vlaneseq
    %v189 = vshrl.u32 %v188, 7
    %v190 = vsub.s32 %v187, %v189
    %v191 = vrot.slane %v175, %v190
    %v193 = vunpack.c.l.s4 1983009808
    %v194 = vunpack.c.0.s8 %v193
    %v195 = vlaneseq
    %v196 = vshrl.u32 %v195, 7
    %v197 = vsub.s32 %v194, %v196
    %v198 = vrot.slane %v176, %v197
    %v200 = vunpack.c.l.s4 1983009808
    %v201 = vunpack.c.0.s8 %v200
    %v202 = vlaneseq
    %v203 = vshrl.u32 %v202, 7
    %v204 = vsub.s32 %v201, %v203
    %v205 = vrot.slane %v177, %v204
    %v206 = vcombine.low %v184, %v198
    %v207 = vcombine.high %v184, %v198
    %v208 = vcombine.low %v191, %v205
    %v209 = vcombine.high %v191, %v205
    %v210 = vcombine.low %v79, %v81
    %v211 = vcombine.high %v79, %v81
    %v212 = vcombine.low %v83, %v85
    %v213 = vcombine.high %v83, %v85
    %v215 = vunpack.c.l.s4 1983009808
    %v216 = vunpack.c.0.s8 %v215
    %v217 = vlaneseq
    %v218 = vshrl.u32 %v217, 7
    %v219 = vsub.s32 %v216, %v218
    %v220 = vrot.slane %v210, %v219
    %v222 = vunpack.c.l.s4 1983009808
    %v223 = vunpack.c.0.s8 %v222
    %v224 = vlaneseq
    %v225 = vshrl.u32 %v224, 7
    %v226 = vsub.s32 %v223, %v225
    %v227 = vrot.slane %v211, %v226
    %v229 = vunpack.c.l.s4 1983009808
    %v230 = vunpack.c.0.s8 %v229
    %v231 = vlaneseq
    %v232 = vshrl.u32 %v231, 7
    %v233 = vsub.s32 %v230, %v232
    %v234 = vrot.slane %v212, %v233
    %v236 = vunpack.c.l.s4 1983009808
    %v237 = vunpack.c.0.s8 %v236
    %v238 = vlaneseq
    %v239 = vshrl.u32 %v238, 7
    %v240 = vsub.s32 %v237, %v239
    %v241 = vrot.slane %v213, %v240
    %v242 = vcombine.low %v220, %v234
    %v243 = vcombine.high %v220, %v234
    %v244 = vcombine.low %v227, %v241
    %v245 = vcombine.high %v227, %v241
    %v262 = vadd.f32 %v134, %v135
    %v263 = vadd.f32 %v262, %v136
    %v264 = vadd.f32 %v263, %v137
    %v265 = vadd.f32 %v264, %v170
    %v266 = vadd.f32 %v265, %v171
    %v267 = vadd.f32 %v266, %v172
    %v268 = vadd.f32 %v267, %v173
    %269 = vadd.xlane.f32.xlu0 %v268
    %v270 = vpop.xlane.xlu0 %269
    %v271 = vadd.f32 %v206, %v207
    %v272 = vadd.f32 %v271, %v208
    %v273 = vadd.f32 %v272, %v209
    %v274 = vadd.f32 %v273, %v242
    %v275 = vadd.f32 %v274, %v243
    %v276 = vadd.f32 %v275, %v244
    %v277 = vadd.f32 %v276, %v245
    %278 = vadd.xlane.f32.xlu0 %v277
    %v279 = vpop.xlane.xlu0 %278
    %v280 = vrcp.pop 1024.0
    %v281 = vmul.f32 %v270, %v280
    %v282 = vmul.f32 %v279, %v280
    %v283 = vmul.f32 %v70, %v70
    %v284 = vmul.f32 %v71, %v71
    %v285 = vmul.f32 %v72, %v72
    %v286 = vmul.f32 %v73, %v73
    %v287 = vmul.f32 %v74, %v74
    %v288 = vmul.f32 %v75, %v75
    %v289 = vmul.f32 %v76, %v76
    %v290 = vmul.f32 %v77, %v77
    %v291 = vmul.f32 %v78, %v78
    %v292 = vmul.f32 %v79, %v79
    %v293 = vmul.f32 %v80, %v80
    %v294 = vmul.f32 %v81, %v81
    %v295 = vmul.f32 %v82, %v82
    %v296 = vmul.f32 %v83, %v83
    %v297 = vmul.f32 %v84, %v84
    %v298 = vmul.f32 %v85, %v85
    %v315 = vcombine.low %v283, %v285
    %v316 = vcombine.high %v283, %v285
    %v317 = vcombine.low %v287, %v289
    %v318 = vcombine.high %v287, %v289
    %v320 = vunpack.c.l.s4 1983009808
    %v321 = vunpack.c.0.s8 %v320
    %v322 = vlaneseq
    %v323 = vshrl.u32 %v322, 7
    %v324 = vsub.s32 %v321, %v323
    %v325 = vrot.slane %v315, %v324
    %v327 = vunpack.c.l.s4 1983009808
    %v328 = vunpack.c.0.s8 %v327
    %v329 = vlaneseq
    %v330 = vshrl.u32 %v329, 7
    %v331 = vsub.s32 %v328, %v330
    %v332 = vrot.slane %v316, %v331
    %v334 = vunpack.c.l.s4 1983009808
    %v335 = vunpack.c.0.s8 %v334
    %v336 = vlaneseq
    %v337 = vshrl.u32 %v336, 7
    %v338 = vsub.s32 %v335, %v337
    %v339 = vrot.slane %v317, %v338
    %v341 = vunpack.c.l.s4 1983009808
    %v342 = vunpack.c.0.s8 %v341
    %v343 = vlaneseq
    %v344 = vshrl.u32 %v343, 7
    %v345 = vsub.s32 %v342, %v344
    %v346 = vrot.slane %v318, %v345
    %v347 = vcombine.low %v325, %v339
    %v348 = vcombine.high %v325, %v339
    %v349 = vcombine.low %v332, %v346
    %v350 = vcombine.high %v332, %v346
    %v351 = vcombine.low %v284, %v286
    %v352 = vcombine.high %v284, %v286
    %v353 = vcombine.low %v288, %v290
    %v354 = vcombine.high %v288, %v290
    %v356 = vunpack.c.l.s4 1983009808
    %v357 = vunpack.c.0.s8 %v356
    %v358 = vlaneseq
    %v359 = vshrl.u32 %v358, 7
    %v360 = vsub.s32 %v357, %v359
    %v361 = vrot.slane %v351, %v360
    %v363 = vunpack.c.l.s4 1983009808
    %v364 = vunpack.c.0.s8 %v363
    %v365 = vlaneseq
    %v366 = vshrl.u32 %v365, 7
    %v367 = vsub.s32 %v364, %v366
    %v368 = vrot.slane %v352, %v367
    %v370 = vunpack.c.l.s4 1983009808
    %v371 = vunpack.c.0.s8 %v370
    %v372 = vlaneseq
    %v373 = vshrl.u32 %v372, 7
    %v374 = vsub.s32 %v371, %v373
    %v375 = vrot.slane %v353, %v374
    %v377 = vunpack.c.l.s4 1983009808
    %v378 = vunpack.c.0.s8 %v377
    %v379 = vlaneseq
    %v380 = vshrl.u32 %v379, 7
    %v381 = vsub.s32 %v378, %v380
    %v382 = vrot.slane %v354, %v381
    %v383 = vcombine.low %v361, %v375
    %v384 = vcombine.high %v361, %v375
    %v385 = vcombine.low %v368, %v382
    %v386 = vcombine.high %v368, %v382
    %v387 = vcombine.low %v291, %v293
    %v388 = vcombine.high %v291, %v293
    %v389 = vcombine.low %v295, %v297
    %v390 = vcombine.high %v295, %v297
    %v392 = vunpack.c.l.s4 1983009808
    %v393 = vunpack.c.0.s8 %v392
    %v394 = vlaneseq
    %v395 = vshrl.u32 %v394, 7
    %v396 = vsub.s32 %v393, %v395
    %v397 = vrot.slane %v387, %v396
    %v399 = vunpack.c.l.s4 1983009808
    %v400 = vunpack.c.0.s8 %v399
    %v401 = vlaneseq
    %v402 = vshrl.u32 %v401, 7
    %v403 = vsub.s32 %v400, %v402
    %v404 = vrot.slane %v388, %v403
    %v406 = vunpack.c.l.s4 1983009808
    %v407 = vunpack.c.0.s8 %v406
    %v408 = vlaneseq
    %v409 = vshrl.u32 %v408, 7
    %v410 = vsub.s32 %v407, %v409
    %v411 = vrot.slane %v389, %v410
    %v413 = vunpack.c.l.s4 1983009808
    %v414 = vunpack.c.0.s8 %v413
    %v415 = vlaneseq
    %v416 = vshrl.u32 %v415, 7
    %v417 = vsub.s32 %v414, %v416
    %v418 = vrot.slane %v390, %v417
    %v419 = vcombine.low %v397, %v411
    %v420 = vcombine.high %v397, %v411
    %v421 = vcombine.low %v404, %v418
    %v422 = vcombine.high %v404, %v418
    %v423 = vcombine.low %v292, %v294
    %v424 = vcombine.high %v292, %v294
    %v425 = vcombine.low %v296, %v298
    %v426 = vcombine.high %v296, %v298
    %v428 = vunpack.c.l.s4 1983009808
    %v429 = vunpack.c.0.s8 %v428
    %v430 = vlaneseq
    %v431 = vshrl.u32 %v430, 7
    %v432 = vsub.s32 %v429, %v431
    %v433 = vrot.slane %v423, %v432
    %v435 = vunpack.c.l.s4 1983009808
    %v436 = vunpack.c.0.s8 %v435
    %v437 = vlaneseq
    %v438 = vshrl.u32 %v437, 7
    %v439 = vsub.s32 %v436, %v438
    %v440 = vrot.slane %v424, %v439
    %v442 = vunpack.c.l.s4 1983009808
    %v443 = vunpack.c.0.s8 %v442
    %v444 = vlaneseq
    %v445 = vshrl.u32 %v444, 7
    %v446 = vsub.s32 %v443, %v445
    %v447 = vrot.slane %v425, %v446
    %v449 = vunpack.c.l.s4 1983009808
    %v450 = vunpack.c.0.s8 %v449
    %v451 = vlaneseq
    %v452 = vshrl.u32 %v451, 7
    %v453 = vsub.s32 %v450, %v452
    %v454 = vrot.slane %v426, %v453
    %v455 = vcombine.low %v433, %v447
    %v456 = vcombine.high %v433, %v447
    %v457 = vcombine.low %v440, %v454
    %v458 = vcombine.high %v440, %v454
    %v475 = vadd.f32 %v347, %v348
    %v476 = vadd.f32 %v475, %v349
    %v477 = vadd.f32 %v476, %v350
    %v478 = vadd.f32 %v477, %v383
    %v479 = vadd.f32 %v478, %v384
    %v480 = vadd.f32 %v479, %v385
    %v481 = vadd.f32 %v480, %v386
    %482 = vadd.xlane.f32.xlu0 %v481
    %v483 = vpop.xlane.xlu0 %482
    %v484 = vadd.f32 %v419, %v420
    %v485 = vadd.f32 %v484, %v421
    %v486 = vadd.f32 %v485, %v422
    %v487 = vadd.f32 %v486, %v455
    %v488 = vadd.f32 %v487, %v456
    %v489 = vadd.f32 %v488, %v457
    %v490 = vadd.f32 %v489, %v458
    %491 = vadd.xlane.f32.xlu0 %v490
    %v492 = vpop.xlane.xlu0 %491
    %v493 = vmul.f32 %v483, %v280
    %v494 = vmul.f32 %v492, %v280
    %v495 = vmul.f32 %v281, %v281
    %v496 = vmul.f32 %v282, %v282
    %v497 = vsub.f32 %v493, %v495
    %v498 = vsub.f32 %v494, %v496
    %v499 = vmax.f32 %v497, 0.0
    %v500 = vmax.f32 %v498, 0.0
    %v504 = vunpack.c.l.s4 269488144
    %v505 = vunpack.c.0.s8 %v504
    %v506 = vlaneseq
    %v507 = vshrl.u32 %v506, 7
    %v508 = vsub.s32 %v505, %v507
    %v509 = vrot.slane %v281, %v508
    %v511 = vunpack.c.l.s4 842150450
    %v512 = vunpack.c.0.s8 %v511
    %v513 = vlaneseq
    %v514 = vshrl.u32 %v513, 7
    %v515 = vsub.s32 %v512, %v514
    %v516 = vrot.slane %v281, %v515
    %v518 = vunpack.c.l.s4 1414812756
    %v519 = vunpack.c.0.s8 %v518
    %v520 = vlaneseq
    %v521 = vshrl.u32 %v520, 7
    %v522 = vsub.s32 %v519, %v521
    %v523 = vrot.slane %v281, %v522
    %v525 = vunpack.c.l.s4 1987475062
    %v526 = vunpack.c.0.s8 %v525
    %v527 = vlaneseq
    %v528 = vshrl.u32 %v527, 7
    %v529 = vsub.s32 %v526, %v528
    %v530 = vrot.slane %v281, %v529
    %v532 = vunpack.c.l.s4 269488144
    %v533 = vunpack.c.0.s8 %v532
    %v534 = vlaneseq
    %v535 = vshrl.u32 %v534, 7
    %v536 = vsub.s32 %v533, %v535
    %v537 = vrot.slane %v282, %v536
    %v539 = vunpack.c.l.s4 842150450
    %v540 = vunpack.c.0.s8 %v539
    %v541 = vlaneseq
    %v542 = vshrl.u32 %v541, 7
    %v543 = vsub.s32 %v540, %v542
    %v544 = vrot.slane %v282, %v543
    %v546 = vunpack.c.l.s4 1414812756
    %v547 = vunpack.c.0.s8 %v546
    %v548 = vlaneseq
    %v549 = vshrl.u32 %v548, 7
    %v550 = vsub.s32 %v547, %v549
    %v551 = vrot.slane %v282, %v550
    %v553 = vunpack.c.l.s4 1987475062
    %v554 = vunpack.c.0.s8 %v553
    %v555 = vlaneseq
    %v556 = vshrl.u32 %v555, 7
    %v557 = vsub.s32 %v554, %v556
    %v558 = vrot.slane %v282, %v557
    %v567 = vsub.f32 %v70, %v509
    %v568 = vsub.f32 %v71, %v509
    %v569 = vsub.f32 %v72, %v516
    %v570 = vsub.f32 %v73, %v516
    %v571 = vsub.f32 %v74, %v523
    %v572 = vsub.f32 %v75, %v523
    %v573 = vsub.f32 %v76, %v530
    %v574 = vsub.f32 %v77, %v530
    %v575 = vsub.f32 %v78, %v537
    %v576 = vsub.f32 %v79, %v537
    %v577 = vsub.f32 %v80, %v544
    %v578 = vsub.f32 %v81, %v544
    %v579 = vsub.f32 %v82, %v551
    %v580 = vsub.f32 %v83, %v551
    %v581 = vsub.f32 %v84, %v558
    %v582 = vsub.f32 %v85, %v558
    %v583 = vadd.f32 %v499, 1e-05
    %v584 = vadd.f32 %v500, 1e-05
    %v585 = vrsqrt.pop %v583
    %v586 = vrsqrt.pop %v584
    %v590 = vunpack.c.l.s4 269488144
    %v591 = vunpack.c.0.s8 %v590
    %v592 = vlaneseq
    %v593 = vshrl.u32 %v592, 7
    %v594 = vsub.s32 %v591, %v593
    %v595 = vrot.slane %v585, %v594
    %v597 = vunpack.c.l.s4 842150450
    %v598 = vunpack.c.0.s8 %v597
    %v599 = vlaneseq
    %v600 = vshrl.u32 %v599, 7
    %v601 = vsub.s32 %v598, %v600
    %v602 = vrot.slane %v585, %v601
    %v604 = vunpack.c.l.s4 1414812756
    %v605 = vunpack.c.0.s8 %v604
    %v606 = vlaneseq
    %v607 = vshrl.u32 %v606, 7
    %v608 = vsub.s32 %v605, %v607
    %v609 = vrot.slane %v585, %v608
    %v611 = vunpack.c.l.s4 1987475062
    %v612 = vunpack.c.0.s8 %v611
    %v613 = vlaneseq
    %v614 = vshrl.u32 %v613, 7
    %v615 = vsub.s32 %v612, %v614
    %v616 = vrot.slane %v585, %v615
    %v618 = vunpack.c.l.s4 269488144
    %v619 = vunpack.c.0.s8 %v618
    %v620 = vlaneseq
    %v621 = vshrl.u32 %v620, 7
    %v622 = vsub.s32 %v619, %v621
    %v623 = vrot.slane %v586, %v622
    %v625 = vunpack.c.l.s4 842150450
    %v626 = vunpack.c.0.s8 %v625
    %v627 = vlaneseq
    %v628 = vshrl.u32 %v627, 7
    %v629 = vsub.s32 %v626, %v628
    %v630 = vrot.slane %v586, %v629
    %v632 = vunpack.c.l.s4 1414812756
    %v633 = vunpack.c.0.s8 %v632
    %v634 = vlaneseq
    %v635 = vshrl.u32 %v634, 7
    %v636 = vsub.s32 %v633, %v635
    %v637 = vrot.slane %v586, %v636
    %v639 = vunpack.c.l.s4 1987475062
    %v640 = vunpack.c.0.s8 %v639
    %v641 = vlaneseq
    %v642 = vshrl.u32 %v641, 7
    %v643 = vsub.s32 %v640, %v642
    %v644 = vrot.slane %v586, %v643
    %v653 = vmul.f32 %v567, %v595
    %v654 = vmul.f32 %v568, %v595
    %v655 = vmul.f32 %v569, %v602
    %v656 = vmul.f32 %v570, %v602
    %v657 = vmul.f32 %v571, %v609
    %v658 = vmul.f32 %v572, %v609
    %v659 = vmul.f32 %v573, %v616
    %v660 = vmul.f32 %v574, %v616
    %v661 = vmul.f32 %v575, %v623
    %v662 = vmul.f32 %v576, %v623
    %v663 = vmul.f32 %v577, %v630
    %v664 = vmul.f32 %v578, %v630
    %v665 = vmul.f32 %v579, %v637
    %v666 = vmul.f32 %v580, %v637
    %v667 = vmul.f32 %v581, %v644
    %v668 = vmul.f32 %v582, %v644
    %v685 = vcombine.low %v653, %v655
    %v686 = vcombine.high %v653, %v655
    %v687 = vcombine.low %v657, %v659
    %v688 = vcombine.high %v657, %v659
    %v690 = vunpack.c.l.s4 1983009808
    %v691 = vunpack.c.0.s8 %v690
    %v692 = vlaneseq
    %v693 = vshrl.u32 %v692, 7
    %v694 = vsub.s32 %v691, %v693
    %v695 = vrot.slane %v685, %v694
    %v697 = vunpack.c.l.s4 1983009808
    %v698 = vunpack.c.0.s8 %v697
    %v699 = vlaneseq
    %v700 = vshrl.u32 %v699, 7
    %v701 = vsub.s32 %v698, %v700
    %v702 = vrot.slane %v686, %v701
    %v704 = vunpack.c.l.s4 1983009808
    %v705 = vunpack.c.0.s8 %v704
    %v706 = vlaneseq
    %v707 = vshrl.u32 %v706, 7
    %v708 = vsub.s32 %v705, %v707
    %v709 = vrot.slane %v687, %v708
    %v711 = vunpack.c.l.s4 1983009808
    %v712 = vunpack.c.0.s8 %v711
    %v713 = vlaneseq
    %v714 = vshrl.u32 %v713, 7
    %v715 = vsub.s32 %v712, %v714
    %v716 = vrot.slane %v688, %v715
    %v717 = vcombine.low %v695, %v709
    %v718 = vcombine.high %v695, %v709
    %v719 = vcombine.low %v702, %v716
    %v720 = vcombine.high %v702, %v716
    %v721 = vcombine.low %v654, %v656
    %v722 = vcombine.high %v654, %v656
    %v723 = vcombine.low %v658, %v660
    %v724 = vcombine.high %v658, %v660
    %v726 = vunpack.c.l.s4 1983009808
    %v727 = vunpack.c.0.s8 %v726
    %v728 = vlaneseq
    %v729 = vshrl.u32 %v728, 7
    %v730 = vsub.s32 %v727, %v729
    %v731 = vrot.slane %v721, %v730
    %v733 = vunpack.c.l.s4 1983009808
    %v734 = vunpack.c.0.s8 %v733
    %v735 = vlaneseq
    %v736 = vshrl.u32 %v735, 7
    %v737 = vsub.s32 %v734, %v736
    %v738 = vrot.slane %v722, %v737
    %v740 = vunpack.c.l.s4 1983009808
    %v741 = vunpack.c.0.s8 %v740
    %v742 = vlaneseq
    %v743 = vshrl.u32 %v742, 7
    %v744 = vsub.s32 %v741, %v743
    %v745 = vrot.slane %v723, %v744
    %v747 = vunpack.c.l.s4 1983009808
    %v748 = vunpack.c.0.s8 %v747
    %v749 = vlaneseq
    %v750 = vshrl.u32 %v749, 7
    %v751 = vsub.s32 %v748, %v750
    %v752 = vrot.slane %v724, %v751
    %v753 = vcombine.low %v731, %v745
    %v754 = vcombine.high %v731, %v745
    %v755 = vcombine.low %v738, %v752
    %v756 = vcombine.high %v738, %v752
    %v757 = vcombine.low %v661, %v663
    %v758 = vcombine.high %v661, %v663
    %v759 = vcombine.low %v665, %v667
    %v760 = vcombine.high %v665, %v667
    %v762 = vunpack.c.l.s4 1983009808
    %v763 = vunpack.c.0.s8 %v762
    %v764 = vlaneseq
    %v765 = vshrl.u32 %v764, 7
    %v766 = vsub.s32 %v763, %v765
    %v767 = vrot.slane %v757, %v766
    %v769 = vunpack.c.l.s4 1983009808
    %v770 = vunpack.c.0.s8 %v769
    %v771 = vlaneseq
    %v772 = vshrl.u32 %v771, 7
    %v773 = vsub.s32 %v770, %v772
    %v774 = vrot.slane %v758, %v773
    %v776 = vunpack.c.l.s4 1983009808
    %v777 = vunpack.c.0.s8 %v776
    %v778 = vlaneseq
    %v779 = vshrl.u32 %v778, 7
    %v780 = vsub.s32 %v777, %v779
    %v781 = vrot.slane %v759, %v780
    %v783 = vunpack.c.l.s4 1983009808
    %v784 = vunpack.c.0.s8 %v783
    %v785 = vlaneseq
    %v786 = vshrl.u32 %v785, 7
    %v787 = vsub.s32 %v784, %v786
    %v788 = vrot.slane %v760, %v787
    %v789 = vcombine.low %v767, %v781
    %v790 = vcombine.high %v767, %v781
    %v791 = vcombine.low %v774, %v788
    %v792 = vcombine.high %v774, %v788
    %v793 = vcombine.low %v662, %v664
    %v794 = vcombine.high %v662, %v664
    %v795 = vcombine.low %v666, %v668
    %v796 = vcombine.high %v666, %v668
    %v798 = vunpack.c.l.s4 1983009808
    %v799 = vunpack.c.0.s8 %v798
    %v800 = vlaneseq
    %v801 = vshrl.u32 %v800, 7
    %v802 = vsub.s32 %v799, %v801
    %v803 = vrot.slane %v793, %v802
    %v805 = vunpack.c.l.s4 1983009808
    %v806 = vunpack.c.0.s8 %v805
    %v807 = vlaneseq
    %v808 = vshrl.u32 %v807, 7
    %v809 = vsub.s32 %v806, %v808
    %v810 = vrot.slane %v794, %v809
    %v812 = vunpack.c.l.s4 1983009808
    %v813 = vunpack.c.0.s8 %v812
    %v814 = vlaneseq
    %v815 = vshrl.u32 %v814, 7
    %v816 = vsub.s32 %v813, %v815
    %v817 = vrot.slane %v795, %v816
    %v819 = vunpack.c.l.s4 1983009808
    %v820 = vunpack.c.0.s8 %v819
    %v821 = vlaneseq
    %v822 = vshrl.u32 %v821, 7
    %v823 = vsub.s32 %v820, %v822
    %v824 = vrot.slane %v796, %v823
    %v825 = vcombine.low %v803, %v817
    %v826 = vcombine.high %v803, %v817
    %v827 = vcombine.low %v810, %v824
    %v828 = vcombine.high %v810, %v824
    %v845 = vpack.c.bf16 %v789, %v717
    %v846 = vpack.c.bf16 %v790, %v718
    %v847 = vpack.c.bf16 %v791, %v719
    %v848 = vpack.c.bf16 %v792, %v720
    %v849 = vpack.c.bf16 %v825, %v753
    %v850 = vpack.c.bf16 %v826, %v754
    %v851 = vpack.c.bf16 %v827, %v755
    %v852 = vpack.c.bf16 %v828, %v756
    %v853 = vld [vmem:[#allocation5] sm:$0xff]
    %v854 = vld [vmem:[#allocation5 + $0x8] sm:$0xff]
    %v855 = vld [vmem:[#allocation5 + $0x10] sm:$0xff]
    %v856 = vld [vmem:[#allocation5 + $0x18] sm:$0xff]
    %v857 = vld [vmem:[#allocation5 + $0x20] sm:$0xff]
    %v858 = vld [vmem:[#allocation5 + $0x28] sm:$0xff]
    %v859 = vld [vmem:[#allocation5 + $0x30] sm:$0xff]
    %v860 = vld [vmem:[#allocation5 + $0x38] sm:$0xff]
    %v861 = vld [vmem:[#allocation5 + $0x40] sm:$0xff]
    %v862 = vld [vmem:[#allocation5 + $0x48] sm:$0xff]
    %v863 = vld [vmem:[#allocation5 + $0x50] sm:$0xff]
    %v864 = vld [vmem:[#allocation5 + $0x58] sm:$0xff]
    %v865 = vld [vmem:[#allocation5 + $0x60] sm:$0xff]
    %v866 = vld [vmem:[#allocation5 + $0x68] sm:$0xff]
    %v867 = vld [vmem:[#allocation5 + $0x70] sm:$0xff]
    %v868 = vld [vmem:[#allocation5 + $0x78] sm:$0xff]
    %v869 = vld [vmem:[#allocation5 + $0x80] sm:$0xff]
    %v870 = vld [vmem:[#allocation5 + $0x88] sm:$0xff]
    %v871 = vld [vmem:[#allocation5 + $0x90] sm:$0xff]
    %v872 = vld [vmem:[#allocation5 + $0x98] sm:$0xff]
    %v873 = vld [vmem:[#allocation5 + $0xa0] sm:$0xff]
    %v874 = vld [vmem:[#allocation5 + $0xa8] sm:$0xff]
    %v875 = vld [vmem:[#allocation5 + $0xb0] sm:$0xff]
    %v876 = vld [vmem:[#allocation5 + $0xb8] sm:$0xff]
    %v877 = vld [vmem:[#allocation5 + $0xc0] sm:$0xff]
    %v878 = vld [vmem:[#allocation5 + $0xc8] sm:$0xff]
    %v879 = vld [vmem:[#allocation5 + $0xd0] sm:$0xff]
    %v880 = vld [vmem:[#allocation5 + $0xd8] sm:$0xff]
    %v881 = vld [vmem:[#allocation5 + $0xe0] sm:$0xff]
    %v882 = vld [vmem:[#allocation5 + $0xe8] sm:$0xff]
    %v883 = vld [vmem:[#allocation5 + $0xf0] sm:$0xff]
    %v884 = vld [vmem:[#allocation5 + $0xf8] sm:$0xff]
    %v885 = vld [vmem:[#allocation5 + $0x100] sm:$0xff]
    %v886 = vld [vmem:[#allocation5 + $0x108] sm:$0xff]
    %v887 = vld [vmem:[#allocation5 + $0x110] sm:$0xff]
    %v888 = vld [vmem:[#allocation5 + $0x118] sm:$0xff]
    %v889 = vld [vmem:[#allocation5 + $0x120] sm:$0xff]
    %v890 = vld [vmem:[#allocation5 + $0x128] sm:$0xff]
    %v891 = vld [vmem:[#allocation5 + $0x130] sm:$0xff]
    %v892 = vld [vmem:[#allocation5 + $0x138] sm:$0xff]
    %v893 = vld [vmem:[#allocation5 + $0x140] sm:$0xff]
    %v894 = vld [vmem:[#allocation5 + $0x148] sm:$0xff]
    %v895 = vld [vmem:[#allocation5 + $0x150] sm:$0xff]
    %v896 = vld [vmem:[#allocation5 + $0x158] sm:$0xff]
    %v897 = vld [vmem:[#allocation5 + $0x160] sm:$0xff]
    %v898 = vld [vmem:[#allocation5 + $0x168] sm:$0xff]
    %v899 = vld [vmem:[#allocation5 + $0x170] sm:$0xff]
    %v900 = vld [vmem:[#allocation5 + $0x178] sm:$0xff]
    %v901 = vld [vmem:[#allocation5 + $0x180] sm:$0xff]
    %v902 = vld [vmem:[#allocation5 + $0x188] sm:$0xff]
    %v903 = vld [vmem:[#allocation5 + $0x190] sm:$0xff]
    %v904 = vld [vmem:[#allocation5 + $0x198] sm:$0xff]
    %v905 = vld [vmem:[#allocation5 + $0x1a0] sm:$0xff]
    %v906 = vld [vmem:[#allocation5 + $0x1a8] sm:$0xff]
    %v907 = vld [vmem:[#allocation5 + $0x1b0] sm:$0xff]
    %v908 = vld [vmem:[#allocation5 + $0x1b8] sm:$0xff]
    %v909 = vld [vmem:[#allocation5 + $0x1c0] sm:$0xff]
    %v910 = vld [vmem:[#allocation5 + $0x1c8] sm:$0xff]
    %v911 = vld [vmem:[#allocation5 + $0x1d0] sm:$0xff]
    %v912 = vld [vmem:[#allocation5 + $0x1d8] sm:$0xff]
    %v913 = vld [vmem:[#allocation5 + $0x1e0] sm:$0xff]
    %v914 = vld [vmem:[#allocation5 + $0x1e8] sm:$0xff]
    %v915 = vld [vmem:[#allocation5 + $0x1f0] sm:$0xff]
    %v916 = vld [vmem:[#allocation5 + $0x1f8] sm:$0xff]
    %v917 = vld [vmem:[#allocation5 + $0x200] sm:$0xff]
    %v918 = vld [vmem:[#allocation5 + $0x208] sm:$0xff]
    %v919 = vld [vmem:[#allocation5 + $0x210] sm:$0xff]
    %v920 = vld [vmem:[#allocation5 + $0x218] sm:$0xff]
    %v921 = vld [vmem:[#allocation5 + $0x220] sm:$0xff]
    %v922 = vld [vmem:[#allocation5 + $0x228] sm:$0xff]
    %v923 = vld [vmem:[#allocation5 + $0x230] sm:$0xff]
    %v924 = vld [vmem:[#allocation5 + $0x238] sm:$0xff]
    %v925 = vld [vmem:[#allocation5 + $0x240] sm:$0xff]
    %v926 = vld [vmem:[#allocation5 + $0x248] sm:$0xff]
    %v927 = vld [vmem:[#allocation5 + $0x250] sm:$0xff]
    %v928 = vld [vmem:[#allocation5 + $0x258] sm:$0xff]
    %v929 = vld [vmem:[#allocation5 + $0x260] sm:$0xff]
    %v930 = vld [vmem:[#allocation5 + $0x268] sm:$0xff]
    %v931 = vld [vmem:[#allocation5 + $0x270] sm:$0xff]
    %v932 = vld [vmem:[#allocation5 + $0x278] sm:$0xff]
    %v933 = vld [vmem:[#allocation5 + $0x280] sm:$0xff]
    %v934 = vld [vmem:[#allocation5 + $0x288] sm:$0xff]
    %v935 = vld [vmem:[#allocation5 + $0x290] sm:$0xff]
    %v936 = vld [vmem:[#allocation5 + $0x298] sm:$0xff]
    %v937 = vld [vmem:[#allocation5 + $0x2a0] sm:$0xff]
    %v938 = vld [vmem:[#allocation5 + $0x2a8] sm:$0xff]
    %v939 = vld [vmem:[#allocation5 + $0x2b0] sm:$0xff]
    %v940 = vld [vmem:[#allocation5 + $0x2b8] sm:$0xff]
    %v941 = vld [vmem:[#allocation5 + $0x2c0] sm:$0xff]
    %v942 = vld [vmem:[#allocation5 + $0x2c8] sm:$0xff]
    %v943 = vld [vmem:[#allocation5 + $0x2d0] sm:$0xff]
    %v944 = vld [vmem:[#allocation5 + $0x2d8] sm:$0xff]
    %v945 = vld [vmem:[#allocation5 + $0x2e0] sm:$0xff]
    %v946 = vld [vmem:[#allocation5 + $0x2e8] sm:$0xff]
    %v947 = vld [vmem:[#allocation5 + $0x2f0] sm:$0xff]
    %v948 = vld [vmem:[#allocation5 + $0x2f8] sm:$0xff]
    %v949 = vld [vmem:[#allocation5 + $0x300] sm:$0xff]
    %v950 = vld [vmem:[#allocation5 + $0x308] sm:$0xff]
    %v951 = vld [vmem:[#allocation5 + $0x310] sm:$0xff]
    %v952 = vld [vmem:[#allocation5 + $0x318] sm:$0xff]
    %v953 = vld [vmem:[#allocation5 + $0x320] sm:$0xff]
    %v954 = vld [vmem:[#allocation5 + $0x328] sm:$0xff]
    %v955 = vld [vmem:[#allocation5 + $0x330] sm:$0xff]
    %v956 = vld [vmem:[#allocation5 + $0x338] sm:$0xff]
    %v957 = vld [vmem:[#allocation5 + $0x340] sm:$0xff]
    %v958 = vld [vmem:[#allocation5 + $0x348] sm:$0xff]
    %v959 = vld [vmem:[#allocation5 + $0x350] sm:$0xff]
    %v960 = vld [vmem:[#allocation5 + $0x358] sm:$0xff]
    %v961 = vld [vmem:[#allocation5 + $0x360] sm:$0xff]
    %v962 = vld [vmem:[#allocation5 + $0x368] sm:$0xff]
    %v963 = vld [vmem:[#allocation5 + $0x370] sm:$0xff]
    %v964 = vld [vmem:[#allocation5 + $0x378] sm:$0xff]
    %v965 = vld [vmem:[#allocation5 + $0x380] sm:$0xff]
    %v966 = vld [vmem:[#allocation5 + $0x388] sm:$0xff]
    %v967 = vld [vmem:[#allocation5 + $0x390] sm:$0xff]
    %v968 = vld [vmem:[#allocation5 + $0x398] sm:$0xff]
    %v969 = vld [vmem:[#allocation5 + $0x3a0] sm:$0xff]
    %v970 = vld [vmem:[#allocation5 + $0x3a8] sm:$0xff]
    %v971 = vld [vmem:[#allocation5 + $0x3b0] sm:$0xff]
    %v972 = vld [vmem:[#allocation5 + $0x3b8] sm:$0xff]
    %v973 = vld [vmem:[#allocation5 + $0x3c0] sm:$0xff]
    %v974 = vld [vmem:[#allocation5 + $0x3c8] sm:$0xff]
    %v975 = vld [vmem:[#allocation5 + $0x3d0] sm:$0xff]
    %v976 = vld [vmem:[#allocation5 + $0x3d8] sm:$0xff]
    %v977 = vld [vmem:[#allocation5 + $0x3e0] sm:$0xff]
    %v978 = vld [vmem:[#allocation5 + $0x3e8] sm:$0xff]
    %v979 = vld [vmem:[#allocation5 + $0x3f0] sm:$0xff]
    %v980 = vld [vmem:[#allocation5 + $0x3f8] sm:$0xff]
    %v981 = vld [vmem:[%s2] sm:$0x3]
    %v983 = vlaneseq
    %v984 = vshrl.u32 %v983, 7
    %v985 = vsub.s32 0, %v984
    %v986 = vrot.slane %v981, %v985
    %v987 = vlaneseq
    %v988 = vshrl.u32 %v987, 7
    %v989 = vsub.s32 1, %v988
    %v990 = vrot.slane %v981, %v989
    %v1121 = vunpack.c.l.b16 %v853
    %v1122 = vunpack.c.h.b16 %v853
    %v1123 = vunpack.c.l.b16 %v854
    %v1124 = vunpack.c.h.b16 %v854
    %v1125 = vunpack.c.l.b16 %v855
    %v1126 = vunpack.c.h.b16 %v855
    %v1127 = vunpack.c.l.b16 %v856
    %v1128 = vunpack.c.h.b16 %v856
    %v1129 = vunpack.c.l.b16 %v857
    %v1130 = vunpack.c.h.b16 %v857
    %v1131 = vunpack.c.l.b16 %v858
    %v1132 = vunpack.c.h.b16 %v858
    %v1133 = vunpack.c.l.b16 %v859
    %v1134 = vunpack.c.h.b16 %v859
    %v1135 = vunpack.c.l.b16 %v860
    %v1136 = vunpack.c.h.b16 %v860
    %v1137 = vunpack.c.l.b16 %v861
    %v1138 = vunpack.c.h.b16 %v861
    %v1139 = vunpack.c.l.b16 %v862
    %v1140 = vunpack.c.h.b16 %v862
    %v1141 = vunpack.c.l.b16 %v863
    %v1142 = vunpack.c.h.b16 %v863
    %v1143 = vunpack.c.l.b16 %v864
    %v1144 = vunpack.c.h.b16 %v864
    %v1145 = vunpack.c.l.b16 %v865
    %v1146 = vunpack.c.h.b16 %v865
    %v1147 = vunpack.c.l.b16 %v866
    %v1148 = vunpack.c.h.b16 %v866
    %v1149 = vunpack.c.l.b16 %v867
    %v1150 = vunpack.c.h.b16 %v867
    %v1151 = vunpack.c.l.b16 %v868
    %v1152 = vunpack.c.h.b16 %v868
    %v1153 = vunpack.c.l.b16 %v869
    %v1154 = vunpack.c.h.b16 %v869
    %v1155 = vunpack.c.l.b16 %v870
    %v1156 = vunpack.c.h.b16 %v870
    %v1157 = vunpack.c.l.b16 %v871
    %v1158 = vunpack.c.h.b16 %v871
    %v1159 = vunpack.c.l.b16 %v872
    %v1160 = vunpack.c.h.b16 %v872
    %v1161 = vunpack.c.l.b16 %v873
    %v1162 = vunpack.c.h.b16 %v873
    %v1163 = vunpack.c.l.b16 %v874
    %v1164 = vunpack.c.h.b16 %v874
    %v1165 = vunpack.c.l.b16 %v875
    %v1166 = vunpack.c.h.b16 %v875
    %v1167 = vunpack.c.l.b16 %v876
    %v1168 = vunpack.c.h.b16 %v876
    %v1169 = vunpack.c.l.b16 %v877
    %v1170 = vunpack.c.h.b16 %v877
    %v1171 = vunpack.c.l.b16 %v878
    %v1172 = vunpack.c.h.b16 %v878
    %v1173 = vunpack.c.l.b16 %v879
    %v1174 = vunpack.c.h.b16 %v879
    %v1175 = vunpack.c.l.b16 %v880
    %v1176 = vunpack.c.h.b16 %v880
    %v1177 = vunpack.c.l.b16 %v881
    %v1178 = vunpack.c.h.b16 %v881
    %v1179 = vunpack.c.l.b16 %v882
    %v1180 = vunpack.c.h.b16 %v882
    %v1181 = vunpack.c.l.b16 %v883
    %v1182 = vunpack.c.h.b16 %v883
    %v1183 = vunpack.c.l.b16 %v884
    %v1184 = vunpack.c.h.b16 %v884
    %v1185 = vunpack.c.l.b16 %v885
    %v1186 = vunpack.c.h.b16 %v885
    %v1187 = vunpack.c.l.b16 %v886
    %v1188 = vunpack.c.h.b16 %v886
    %v1189 = vunpack.c.l.b16 %v887
    %v1190 = vunpack.c.h.b16 %v887
    %v1191 = vunpack.c.l.b16 %v888
    %v1192 = vunpack.c.h.b16 %v888
    %v1193 = vunpack.c.l.b16 %v889
    %v1194 = vunpack.c.h.b16 %v889
    %v1195 = vunpack.c.l.b16 %v890
    %v1196 = vunpack.c.h.b16 %v890
    %v1197 = vunpack.c.l.b16 %v891
    %v1198 = vunpack.c.h.b16 %v891
    %v1199 = vunpack.c.l.b16 %v892
    %v1200 = vunpack.c.h.b16 %v892
    %v1201 = vunpack.c.l.b16 %v893
    %v1202 = vunpack.c.h.b16 %v893
    %v1203 = vunpack.c.l.b16 %v894
    %v1204 = vunpack.c.h.b16 %v894
    %v1205 = vunpack.c.l.b16 %v895
    %v1206 = vunpack.c.h.b16 %v895
    %v1207 = vunpack.c.l.b16 %v896
    %v1208 = vunpack.c.h.b16 %v896
    %v1209 = vunpack.c.l.b16 %v897
    %v1210 = vunpack.c.h.b16 %v897
    %v1211 = vunpack.c.l.b16 %v898
    %v1212 = vunpack.c.h.b16 %v898
    %v1213 = vunpack.c.l.b16 %v899
    %v1214 = vunpack.c.h.b16 %v899
    %v1215 = vunpack.c.l.b16 %v900
    %v1216 = vunpack.c.h.b16 %v900
    %v1217 = vunpack.c.l.b16 %v901
    %v1218 = vunpack.c.h.b16 %v901
    %v1219 = vunpack.c.l.b16 %v902
    %v1220 = vunpack.c.h.b16 %v902
    %v1221 = vunpack.c.l.b16 %v903
    %v1222 = vunpack.c.h.b16 %v903
    %v1223 = vunpack.c.l.b16 %v904
    %v1224 = vunpack.c.h.b16 %v904
    %v1225 = vunpack.c.l.b16 %v905
    %v1226 = vunpack.c.h.b16 %v905
    %v1227 = vunpack.c.l.b16 %v906
    %v1228 = vunpack.c.h.b16 %v906
    %v1229 = vunpack.c.l.b16 %v907
    %v1230 = vunpack.c.h.b16 %v907
    %v1231 = vunpack.c.l.b16 %v908
    %v1232 = vunpack.c.h.b16 %v908
    %v1233 = vunpack.c.l.b16 %v909
    %v1234 = vunpack.c.h.b16 %v909
    %v1235 = vunpack.c.l.b16 %v910
    %v1236 = vunpack.c.h.b16 %v910
    %v1237 = vunpack.c.l.b16 %v911
    %v1238 = vunpack.c.h.b16 %v911
    %v1239 = vunpack.c.l.b16 %v912
    %v1240 = vunpack.c.h.b16 %v912
    %v1241 = vunpack.c.l.b16 %v913
    %v1242 = vunpack.c.h.b16 %v913
    %v1243 = vunpack.c.l.b16 %v914
    %v1244 = vunpack.c.h.b16 %v914
    %v1245 = vunpack.c.l.b16 %v915
    %v1246 = vunpack.c.h.b16 %v915
    %v1247 = vunpack.c.l.b16 %v916
    %v1248 = vunpack.c.h.b16 %v916
    %v1249 = vunpack.c.l.b16 %v917
    %v1250 = vunpack.c.h.b16 %v917
    %v1251 = vunpack.c.l.b16 %v918
    %v1252 = vunpack.c.h.b16 %v918
    %v1253 = vunpack.c.l.b16 %v919
    %v1254 = vunpack.c.h.b16 %v919
    %v1255 = vunpack.c.l.b16 %v920
    %v1256 = vunpack.c.h.b16 %v920
    %v1257 = vunpack.c.l.b16 %v921
    %v1258 = vunpack.c.h.b16 %v921
    %v1259 = vunpack.c.l.b16 %v922
    %v1260 = vunpack.c.h.b16 %v922
    %v1261 = vunpack.c.l.b16 %v923
    %v1262 = vunpack.c.h.b16 %v923
    %v1263 = vunpack.c.l.b16 %v924
    %v1264 = vunpack.c.h.b16 %v924
    %v1265 = vunpack.c.l.b16 %v925
    %v1266 = vunpack.c.h.b16 %v925
    %v1267 = vunpack.c.l.b16 %v926
    %v1268 = vunpack.c.h.b16 %v926
    %v1269 = vunpack.c.l.b16 %v927
    %v1270 = vunpack.c.h.b16 %v927
    %v1271 = vunpack.c.l.b16 %v928
    %v1272 = vunpack.c.h.b16 %v928
    %v1273 = vunpack.c.l.b16 %v929
    %v1274 = vunpack.c.h.b16 %v929
    %v1275 = vunpack.c.l.b16 %v930
    %v1276 = vunpack.c.h.b16 %v930
    %v1277 = vunpack.c.l.b16 %v931
    %v1278 = vunpack.c.h.b16 %v931
    %v1279 = vunpack.c.l.b16 %v932
    %v1280 = vunpack.c.h.b16 %v932
    %v1281 = vunpack.c.l.b16 %v933
    %v1282 = vunpack.c.h.b16 %v933
    %v1283 = vunpack.c.l.b16 %v934
    %v1284 = vunpack.c.h.b16 %v934
    %v1285 = vunpack.c.l.b16 %v935
    %v1286 = vunpack.c.h.b16 %v935
    %v1287 = vunpack.c.l.b16 %v936
    %v1288 = vunpack.c.h.b16 %v936
    %v1289 = vunpack.c.l.b16 %v937
    %v1290 = vunpack.c.h.b16 %v937
    %v1291 = vunpack.c.l.b16 %v938
    %v1292 = vunpack.c.h.b16 %v938
    %v1293 = vunpack.c.l.b16 %v939
    %v1294 = vunpack.c.h.b16 %v939
    %v1295 = vunpack.c.l.b16 %v940
    %v1296 = vunpack.c.h.b16 %v940
    %v1297 = vunpack.c.l.b16 %v941
    %v1298 = vunpack.c.h.b16 %v941
    %v1299 = vunpack.c.l.b16 %v942
    %v1300 = vunpack.c.h.b16 %v942
    %v1301 = vunpack.c.l.b16 %v943
    %v1302 = vunpack.c.h.b16 %v943
    %v1303 = vunpack.c.l.b16 %v944
    %v1304 = vunpack.c.h.b16 %v944
    %v1305 = vunpack.c.l.b16 %v945
    %v1306 = vunpack.c.h.b16 %v945
    %v1307 = vunpack.c.l.b16 %v946
    %v1308 = vunpack.c.h.b16 %v946
    %v1309 = vunpack.c.l.b16 %v947
    %v1310 = vunpack.c.h.b16 %v947
    %v1311 = vunpack.c.l.b16 %v948
    %v1312 = vunpack.c.h.b16 %v948
    %v1313 = vunpack.c.l.b16 %v949
    %v1314 = vunpack.c.h.b16 %v949
    %v1315 = vunpack.c.l.b16 %v950
    %v1316 = vunpack.c.h.b16 %v950
    %v1317 = vunpack.c.l.b16 %v951
    %v1318 = vunpack.c.h.b16 %v951
    %v1319 = vunpack.c.l.b16 %v952
    %v1320 = vunpack.c.h.b16 %v952
    %v1321 = vunpack.c.l.b16 %v953
    %v1322 = vunpack.c.h.b16 %v953
    %v1323 = vunpack.c.l.b16 %v954
    %v1324 = vunpack.c.h.b16 %v954
    %v1325 = vunpack.c.l.b16 %v955
    %v1326 = vunpack.c.h.b16 %v955
    %v1327 = vunpack.c.l.b16 %v956
    %v1328 = vunpack.c.h.b16 %v956
    %v1329 = vunpack.c.l.b16 %v957
    %v1330 = vunpack.c.h.b16 %v957
    %v1331 = vunpack.c.l.b16 %v958
    %v1332 = vunpack.c.h.b16 %v958
    %v1333 = vunpack.c.l.b16 %v959
    %v1334 = vunpack.c.h.b16 %v959
    %v1335 = vunpack.c.l.b16 %v960
    %v1336 = vunpack.c.h.b16 %v960
    %v1337 = vunpack.c.l.b16 %v961
    %v1338 = vunpack.c.h.b16 %v961
    %v1339 = vunpack.c.l.b16 %v962
    %v1340 = vunpack.c.h.b16 %v962
    %v1341 = vunpack.c.l.b16 %v963
    %v1342 = vunpack.c.h.b16 %v963
    %v1343 = vunpack.c.l.b16 %v964
    %v1344 = vunpack.c.h.b16 %v964
    %v1345 = vunpack.c.l.b16 %v965
    %v1346 = vunpack.c.h.b16 %v965
    %v1347 = vunpack.c.l.b16 %v966
    %v1348 = vunpack.c.h.b16 %v966
    %v1349 = vunpack.c.l.b16 %v967
    %v1350 = vunpack.c.h.b16 %v967
    %v1351 = vunpack.c.l.b16 %v968
    %v1352 = vunpack.c.h.b16 %v968
    %v1353 = vunpack.c.l.b16 %v969
    %v1354 = vunpack.c.h.b16 %v969
    %v1355 = vunpack.c.l.b16 %v970
    %v1356 = vunpack.c.h.b16 %v970
    %v1357 = vunpack.c.l.b16 %v971
    %v1358 = vunpack.c.h.b16 %v971
    %v1359 = vunpack.c.l.b16 %v972
    %v1360 = vunpack.c.h.b16 %v972
    %v1361 = vunpack.c.l.b16 %v973
    %v1362 = vunpack.c.h.b16 %v973
    %v1363 = vunpack.c.l.b16 %v974
    %v1364 = vunpack.c.h.b16 %v974
    %v1365 = vunpack.c.l.b16 %v975
    %v1366 = vunpack.c.h.b16 %v975
    %v1367 = vunpack.c.l.b16 %v976
    %v1368 = vunpack.c.h.b16 %v976
    %v1369 = vunpack.c.l.b16 %v977
    %v1370 = vunpack.c.h.b16 %v977
    %v1371 = vunpack.c.l.b16 %v978
    %v1372 = vunpack.c.h.b16 %v978
    %v1373 = vunpack.c.l.b16 %v979
    %v1374 = vunpack.c.h.b16 %v979
    %v1375 = vunpack.c.l.b16 %v980
    %v1376 = vunpack.c.h.b16 %v980
    %v1377 = vpack.c.b16 %v1123, %v1121
    %v1378 = vpack.c.b16 %v1124, %v1122
    %v1379 = vpack.c.b16 %v1127, %v1125
    %v1380 = vpack.c.b16 %v1128, %v1126
    %v1381 = vpack.c.b16 %v1131, %v1129
    %v1382 = vpack.c.b16 %v1132, %v1130
    %v1383 = vpack.c.b16 %v1135, %v1133
    %v1384 = vpack.c.b16 %v1136, %v1134
    %v1385 = vpack.c.b16 %v1139, %v1137
    %v1386 = vpack.c.b16 %v1140, %v1138
    %v1387 = vpack.c.b16 %v1143, %v1141
    %v1388 = vpack.c.b16 %v1144, %v1142
    %v1389 = vpack.c.b16 %v1147, %v1145
    %v1390 = vpack.c.b16 %v1148, %v1146
    %v1391 = vpack.c.b16 %v1151, %v1149
    %v1392 = vpack.c.b16 %v1152, %v1150
    %v1393 = vpack.c.b16 %v1155, %v1153
    %v1394 = vpack.c.b16 %v1156, %v1154
    %v1395 = vpack.c.b16 %v1159, %v1157
    %v1396 = vpack.c.b16 %v1160, %v1158
    %v1397 = vpack.c.b16 %v1163, %v1161
    %v1398 = vpack.c.b16 %v1164, %v1162
    %v1399 = vpack.c.b16 %v1167, %v1165
    %v1400 = vpack.c.b16 %v1168, %v1166
    %v1401 = vpack.c.b16 %v1171, %v1169
    %v1402 = vpack.c.b16 %v1172, %v1170
    %v1403 = vpack.c.b16 %v1175, %v1173
    %v1404 = vpack.c.b16 %v1176, %v1174
    %v1405 = vpack.c.b16 %v1179, %v1177
    %v1406 = vpack.c.b16 %v1180, %v1178
    %v1407 = vpack.c.b16 %v1183, %v1181
    %v1408 = vpack.c.b16 %v1184, %v1182
    %v1409 = vpack.c.b16 %v1187, %v1185
    %v1410 = vpack.c.b16 %v1188, %v1186
    %v1411 = vpack.c.b16 %v1191, %v1189
    %v1412 = vpack.c.b16 %v1192, %v1190
    %v1413 = vpack.c.b16 %v1195, %v1193
    %v1414 = vpack.c.b16 %v1196, %v1194
    %v1415 = vpack.c.b16 %v1199, %v1197
    %v1416 = vpack.c.b16 %v1200, %v1198
    %v1417 = vpack.c.b16 %v1203, %v1201
    %v1418 = vpack.c.b16 %v1204, %v1202
    %v1419 = vpack.c.b16 %v1207, %v1205
    %v1420 = vpack.c.b16 %v1208, %v1206
    %v1421 = vpack.c.b16 %v1211, %v1209
    %v1422 = vpack.c.b16 %v1212, %v1210
    %v1423 = vpack.c.b16 %v1215, %v1213
    %v1424 = vpack.c.b16 %v1216, %v1214
    %v1425 = vpack.c.b16 %v1219, %v1217
    %v1426 = vpack.c.b16 %v1220, %v1218
    %v1427 = vpack.c.b16 %v1223, %v1221
    %v1428 = vpack.c.b16 %v1224, %v1222
    %v1429 = vpack.c.b16 %v1227, %v1225
    %v1430 = vpack.c.b16 %v1228, %v1226
    %v1431 = vpack.c.b16 %v1231, %v1229
    %v1432 = vpack.c.b16 %v1232, %v1230
    %v1433 = vpack.c.b16 %v1235, %v1233
    %v1434 = vpack.c.b16 %v1236, %v1234
    %v1435 = vpack.c.b16 %v1239, %v1237
    %v1436 = vpack.c.b16 %v1240, %v1238
    %v1437 = vpack.c.b16 %v1243, %v1241
    %v1438 = vpack.c.b16 %v1244, %v1242
    %v1439 = vpack.c.b16 %v1247, %v1245
    %v1440 = vpack.c.b16 %v1248, %v1246
    %v1441 = vpack.c.b16 %v1251, %v1249
    %v1442 = vpack.c.b16 %v1252, %v1250
    %v1443 = vpack.c.b16 %v1255, %v1253
    %v1444 = vpack.c.b16 %v1256, %v1254
    %v1445 = vpack.c.b16 %v1259, %v1257
    %v1446 = vpack.c.b16 %v1260, %v1258
    %v1447 = vpack.c.b16 %v1263, %v1261
    %v1448 = vpack.c.b16 %v1264, %v1262
    %v1449 = vpack.c.b16 %v1267, %v1265
    %v1450 = vpack.c.b16 %v1268, %v1266
    %v1451 = vpack.c.b16 %v1271, %v1269
    %v1452 = vpack.c.b16 %v1272, %v1270
    %v1453 = vpack.c.b16 %v1275, %v1273
    %v1454 = vpack.c.b16 %v1276, %v1274
    %v1455 = vpack.c.b16 %v1279, %v1277
    %v1456 = vpack.c.b16 %v1280, %v1278
    %v1457 = vpack.c.b16 %v1283, %v1281
    %v1458 = vpack.c.b16 %v1284, %v1282
    %v1459 = vpack.c.b16 %v1287, %v1285
    %v1460 = vpack.c.b16 %v1288, %v1286
    %v1461 = vpack.c.b16 %v1291, %v1289
    %v1462 = vpack.c.b16 %v1292, %v1290
    %v1463 = vpack.c.b16 %v1295, %v1293
    %v1464 = vpack.c.b16 %v1296, %v1294
    %v1465 = vpack.c.b16 %v1299, %v1297
    %v1466 = vpack.c.b16 %v1300, %v1298
    %v1467 = vpack.c.b16 %v1303, %v1301
    %v1468 = vpack.c.b16 %v1304, %v1302
    %v1469 = vpack.c.b16 %v1307, %v1305
    %v1470 = vpack.c.b16 %v1308, %v1306
    %v1471 = vpack.c.b16 %v1311, %v1309
    %v1472 = vpack.c.b16 %v1312, %v1310
    %v1473 = vpack.c.b16 %v1315, %v1313
    %v1474 = vpack.c.b16 %v1316, %v1314
    %v1475 = vpack.c.b16 %v1319, %v1317
    %v1476 = vpack.c.b16 %v1320, %v1318
    %v1477 = vpack.c.b16 %v1323, %v1321
    %v1478 = vpack.c.b16 %v1324, %v1322
    %v1479 = vpack.c.b16 %v1327, %v1325
    %v1480 = vpack.c.b16 %v1328, %v1326
    %v1481 = vpack.c.b16 %v1331, %v1329
    %v1482 = vpack.c.b16 %v1332, %v1330
    %v1483 = vpack.c.b16 %v1335, %v1333
    %v1484 = vpack.c.b16 %v1336, %v1334
    %v1485 = vpack.c.b16 %v1339, %v1337
    %v1486 = vpack.c.b16 %v1340, %v1338
    %v1487 = vpack.c.b16 %v1343, %v1341
    %v1488 = vpack.c.b16 %v1344, %v1342
    %v1489 = vpack.c.b16 %v1347, %v1345
    %v1490 = vpack.c.b16 %v1348, %v1346
    %v1491 = vpack.c.b16 %v1351, %v1349
    %v1492 = vpack.c.b16 %v1352, %v1350
    %v1493 = vpack.c.b16 %v1355, %v1353
    %v1494 = vpack.c.b16 %v1356, %v1354
    %v1495 = vpack.c.b16 %v1359, %v1357
    %v1496 = vpack.c.b16 %v1360, %v1358
    %v1497 = vpack.c.b16 %v1363, %v1361
    %v1498 = vpack.c.b16 %v1364, %v1362
    %v1499 = vpack.c.b16 %v1367, %v1365
    %v1500 = vpack.c.b16 %v1368, %v1366
    %v1501 = vpack.c.b16 %v1371, %v1369
    %v1502 = vpack.c.b16 %v1372, %v1370
    %v1503 = vpack.c.b16 %v1375, %v1373
    %v1504 = vpack.c.b16 %v1376, %v1374
    %1633 = vmatprep.subr.bf16.mxu0 %v1392
    %1634 = vmatpush1.bf16.msra.mxu0 %v1391
    %1635 = vmatprep.subr.bf16.mxu0 %v1390
    %1636 = vmatpush1.bf16.msra.mxu0 %v1389
    %1637 = vmatprep.subr.bf16.mxu0 %v1388
    %1638 = vmatpush1.bf16.msra.mxu0 %v1387
    %1639 = vmatprep.subr.bf16.mxu0 %v1386
    %1640 = vmatpush1.bf16.msra.mxu0 %v1385
    %1641 = vmatprep.subr.bf16.mxu0 %v1384
    %1642 = vmatpush1.bf16.msra.mxu0 %v1383
    %1643 = vmatprep.subr.bf16.mxu0 %v1382
    %1644 = vmatpush1.bf16.msra.mxu0 %v1381
    %1645 = vmatprep.subr.bf16.mxu0 %v1380
    %1646 = vmatpush1.bf16.msra.mxu0 %v1379
    %1647 = vmatprep.subr.bf16.mxu0 %v1378
    %1648 = vmatpush1.bf16.msra.mxu0 %v1377
    %1649 = vmatprep.subr.bf16.mxu0 %v1408
    %1650 = vmatpush2.bf16.msra.mxu0 %v1407
    %1651 = vmatprep.subr.bf16.mxu0 %v1406
    %1652 = vmatpush2.bf16.msra.mxu0 %v1405
    %1653 = vmatprep.subr.bf16.mxu0 %v1404
    %1654 = vmatpush2.bf16.msra.mxu0 %v1403
    %1655 = vmatprep.subr.bf16.mxu0 %v1402
    %1656 = vmatpush2.bf16.msra.mxu0 %v1401
    %1657 = vmatprep.subr.bf16.mxu0 %v1400
    %1658 = vmatpush2.bf16.msra.mxu0 %v1399
    %1659 = vmatprep.subr.bf16.mxu0 %v1398
    %1660 = vmatpush2.bf16.msra.mxu0 %v1397
    %1661 = vmatprep.subr.bf16.mxu0 %v1396
    %1662 = vmatpush2.bf16.msra.mxu0 %v1395
    %1663 = vmatprep.subr.bf16.mxu0 %v1394
    %1664 = vmatpush2.bf16.msra.mxu0 %v1393
    %1665 = vmatprep.mubr.bf16.mxu0 %v846
    %1666 = vmatmul.mubr.bf16.gmra.mxu0 %v845
    %v1667 = vpop.f32.mrf.mxu0
    %v1668 = vadd.f32 %v986, %v1667
    %v1669 = vpop.f32.mrf.mxu0
    %v1670 = vadd.f32 %v990, %v1669
    %v1671 = vpop.f32.mrf.mxu0
    %v1672 = vadd.f32 %v986, %v1671
    %v1673 = vpop.f32.mrf.mxu0
    %v1674 = vadd.f32 %v990, %v1673
    %1675 = vdwg.mxu0
    %1676 = vmatprep.subr.bf16.mxu0 %v1424
    %1677 = vmatpush1.bf16.msra.mxu0 %v1423
    %1678 = vmatprep.subr.bf16.mxu0 %v1422
    %1679 = vmatpush1.bf16.msra.mxu0 %v1421
    %1680 = vmatprep.subr.bf16.mxu0 %v1420
    %1681 = vmatpush1.bf16.msra.mxu0 %v1419
    %1682 = vmatprep.subr.bf16.mxu0 %v1418
    %1683 = vmatpush1.bf16.msra.mxu0 %v1417
    %1684 = vmatprep.subr.bf16.mxu0 %v1416
    %1685 = vmatpush1.bf16.msra.mxu0 %v1415
    %1686 = vmatprep.subr.bf16.mxu0 %v1414
    %1687 = vmatpush1.bf16.msra.mxu0 %v1413
    %1688 = vmatprep.subr.bf16.mxu0 %v1412
    %1689 = vmatpush1.bf16.msra.mxu0 %v1411
    %1690 = vmatprep.subr.bf16.mxu0 %v1410
    %1691 = vmatpush1.bf16.msra.mxu0 %v1409
    %1692 = vmatprep.subr.bf16.mxu0 %v1440
    %1693 = vmatpush2.bf16.msra.mxu0 %v1439
    %1694 = vmatprep.subr.bf16.mxu0 %v1438
    %1695 = vmatpush2.bf16.msra.mxu0 %v1437
    %1696 = vmatprep.subr.bf16.mxu0 %v1436
    %1697 = vmatpush2.bf16.msra.mxu0 %v1435
    %1698 = vmatprep.subr.bf16.mxu0 %v1434
    %1699 = vmatpush2.bf16.msra.mxu0 %v1433
    %1700 = vmatprep.subr.bf16.mxu0 %v1432
    %1701 = vmatpush2.bf16.msra.mxu0 %v1431
    %1702 = vmatprep.subr.bf16.mxu0 %v1430
    %1703 = vmatpush2.bf16.msra.mxu0 %v1429
    %1704 = vmatprep.subr.bf16.mxu0 %v1428
    %1705 = vmatpush2.bf16.msra.mxu0 %v1427
    %1706 = vmatprep.subr.bf16.mxu0 %v1426
    %1707 = vmatpush2.bf16.msra.mxu0 %v1425
    %1708 = vmatprep.mubr.bf16.mxu0 %v848
    %1709 = vmatmul.mubr.bf16.gmra.mxu0 %v847
    %v1710 = vpop.f32.mrf.mxu0
    %v1711 = vadd.f32 %v1668, %v1710
    %v1712 = vpop.f32.mrf.mxu0
    %v1713 = vadd.f32 %v1670, %v1712
    %v1714 = vpop.f32.mrf.mxu0
    %v1715 = vadd.f32 %v1672, %v1714
    %v1716 = vpop.f32.mrf.mxu0
    %v1717 = vadd.f32 %v1674, %v1716
    %1718 = vdwg.mxu0
    %1719 = vmatprep.subr.bf16.mxu0 %v1456
    %1720 = vmatpush1.bf16.msra.mxu0 %v1455
    %1721 = vmatprep.subr.bf16.mxu0 %v1454
    %1722 = vmatpush1.bf16.msra.mxu0 %v1453
    %1723 = vmatprep.subr.bf16.mxu0 %v1452
    %1724 = vmatpush1.bf16.msra.mxu0 %v1451
    %1725 = vmatprep.subr.bf16.mxu0 %v1450
    %1726 = vmatpush1.bf16.msra.mxu0 %v1449
    %1727 = vmatprep.subr.bf16.mxu0 %v1448
    %1728 = vmatpush1.bf16.msra.mxu0 %v1447
    %1729 = vmatprep.subr.bf16.mxu0 %v1446
    %1730 = vmatpush1.bf16.msra.mxu0 %v1445
    %1731 = vmatprep.subr.bf16.mxu0 %v1444
    %1732 = vmatpush1.bf16.msra.mxu0 %v1443
    %1733 = vmatprep.subr.bf16.mxu0 %v1442
    %1734 = vmatpush1.bf16.msra.mxu0 %v1441
    %1735 = vmatprep.subr.bf16.mxu0 %v1472
    %1736 = vmatpush2.bf16.msra.mxu0 %v1471
    %1737 = vmatprep.subr.bf16.mxu0 %v1470
    %1738 = vmatpush2.bf16.msra.mxu0 %v1469
    %1739 = vmatprep.subr.bf16.mxu0 %v1468
    %1740 = vmatpush2.bf16.msra.mxu0 %v1467
    %1741 = vmatprep.subr.bf16.mxu0 %v1466
    %1742 = vmatpush2.bf16.msra.mxu0 %v1465
    %1743 = vmatprep.subr.bf16.mxu0 %v1464
    %1744 = vmatpush2.bf16.msra.mxu0 %v1463
    %1745 = vmatprep.subr.bf16.mxu0 %v1462
    %1746 = vmatpush2.bf16.msra.mxu0 %v1461
    %1747 = vmatprep.subr.bf16.mxu0 %v1460
    %1748 = vmatpush2.bf16.msra.mxu0 %v1459
    %1749 = vmatprep.subr.bf16.mxu0 %v1458
    %1750 = vmatpush2.bf16.msra.mxu0 %v1457
    %1751 = vmatprep.mubr.bf16.mxu0 %v850
    %1752 = vmatmul.mubr.bf16.gmra.mxu0 %v849
    %v1753 = vpop.f32.mrf.mxu0
    %v1754 = vadd.f32 %v1711, %v1753
    %v1755 = vpop.f32.mrf.mxu0
    %v1756 = vadd.f32 %v1713, %v1755
    %v1757 = vpop.f32.mrf.mxu0
    %v1758 = vadd.f32 %v1715, %v1757
    %v1759 = vpop.f32.mrf.mxu0
    %v1760 = vadd.f32 %v1717, %v1759
    %1761 = vdwg.mxu0
    %1762 = vmatprep.subr.bf16.mxu0 %v1488
    %1763 = vmatpush1.bf16.msra.mxu0 %v1487
    %1764 = vmatprep.subr.bf16.mxu0 %v1486
    %1765 = vmatpush1.bf16.msra.mxu0 %v1485
    %1766 = vmatprep.subr.bf16.mxu0 %v1484
    %1767 = vmatpush1.bf16.msra.mxu0 %v1483
    %1768 = vmatprep.subr.bf16.mxu0 %v1482
    %1769 = vmatpush1.bf16.msra.mxu0 %v1481
    %1770 = vmatprep.subr.bf16.mxu0 %v1480
    %1771 = vmatpush1.bf16.msra.mxu0 %v1479
    %1772 = vmatprep.subr.bf16.mxu0 %v1478
    %1773 = vmatpush1.bf16.msra.mxu0 %v1477
    %1774 = vmatprep.subr.bf16.mxu0 %v1476
    %1775 = vmatpush1.bf16.msra.mxu0 %v1475
    %1776 = vmatprep.subr.bf16.mxu0 %v1474
    %1777 = vmatpush1.bf16.msra.mxu0 %v1473
    %1778 = vmatprep.subr.bf16.mxu0 %v1504
    %1779 = vmatpush2.bf16.msra.mxu0 %v1503
    %1780 = vmatprep.subr.bf16.mxu0 %v1502
    %1781 = vmatpush2.bf16.msra.mxu0 %v1501
    %1782 = vmatprep.subr.bf16.mxu0 %v1500
    %1783 = vmatpush2.bf16.msra.mxu0 %v1499
    %1784 = vmatprep.subr.bf16.mxu0 %v1498
    %1785 = vmatpush2.bf16.msra.mxu0 %v1497
    %1786 = vmatprep.subr.bf16.mxu0 %v1496
    %1787 = vmatpush2.bf16.msra.mxu0 %v1495
    %1788 = vmatprep.subr.bf16.mxu0 %v1494
    %1789 = vmatpush2.bf16.msra.mxu0 %v1493
    %1790 = vmatprep.subr.bf16.mxu0 %v1492
    %1791 = vmatpush2.bf16.msra.mxu0 %v1491
    %1792 = vmatprep.subr.bf16.mxu0 %v1490
    %1793 = vmatpush2.bf16.msra.mxu0 %v1489
    %1794 = vmatprep.mubr.bf16.mxu0 %v852
    %1795 = vmatmul.mubr.bf16.gmra.mxu0 %v851
    %v1796 = vpop.f32.mrf.mxu0
    %v1797 = vadd.f32 %v1754, %v1796
    %v1798 = vpop.f32.mrf.mxu0
    %v1799 = vadd.f32 %v1756, %v1798
    %v1800 = vpop.f32.mrf.mxu0
    %v1801 = vadd.f32 %v1758, %v1800
    %v1802 = vpop.f32.mrf.mxu0
    %v1803 = vadd.f32 %v1760, %v1802
    %1804 = vdwg.mxu0
    %vm1805 = vcmp.ge.f32.partialorder %v1797, 0.0
    %vm1806 = vcmp.ge.f32.partialorder %v1799, 0.0
    %vm1807 = vcmp.ge.f32.partialorder %v1801, 0.0
    %vm1808 = vcmp.ge.f32.partialorder %v1803, 0.0
    %v1809 = vmul.f32 %v1797, 0.01
    %v1810 = vmul.f32 %v1799, 0.01
    %v1811 = vmul.f32 %v1801, 0.01
    %v1812 = vmul.f32 %v1803, 0.01
    %v1813 = vsel %vm1805, %v1797, %v1809
    %v1814 = vsel %vm1806, %v1799, %v1810
    %v1815 = vsel %vm1807, %v1801, %v1811
    %v1816 = vsel %vm1808, %v1803, %v1812
    %v1817 = vadd.f32 %v1813, %v1814
    %1818 = vadd.xlane.f32.xlu0 %v1817
    %v1819 = vpop.xlane.xlu0 %1818
    %v1820 = vadd.f32 %v1815, %v1816
    %1821 = vadd.xlane.f32.xlu0 %v1820
    %v1822 = vpop.xlane.xlu0 %1821
    %v1823 = vmul.f32 %v1819, 0.005
    %v1824 = vmul.f32 %v1822, 0.005
    %v1825 = vmul.f32 %v1813, %v1813
    %v1826 = vmul.f32 %v1814, %v1814
    %v1827 = vmul.f32 %v1815, %v1815
    %v1828 = vmul.f32 %v1816, %v1816
    %v1829 = vadd.f32 %v1825, %v1826
    %1830 = vadd.xlane.f32.xlu0 %v1829
    %v1831 = vpop.xlane.xlu0 %1830
    %v1832 = vadd.f32 %v1827, %v1828
    %1833 = vadd.xlane.f32.xlu0 %v1832
    %v1834 = vpop.xlane.xlu0 %1833
    %v1835 = vmul.f32 %v1831, 0.005
    %v1836 = vmul.f32 %v1834, 0.005
    %v1837 = vmul.f32 %v1823, %v1823
    %v1838 = vmul.f32 %v1824, %v1824
    %v1839 = vsub.f32 %v1835, %v1837
    %v1840 = vsub.f32 %v1836, %v1838
    %v1841 = vmax.f32 %v1839, 0.0
    %v1842 = vmax.f32 %v1840, 0.0
    %v1843 = vsub.f32 %v1813, %v1823
    %v1844 = vsub.f32 %v1814, %v1823
    %v1845 = vsub.f32 %v1815, %v1824
    %v1846 = vsub.f32 %v1816, %v1824
    %v1847 = vadd.f32 %v1841, 1e-05
    %v1848 = vadd.f32 %v1842, 1e-05
    %v1849 = vrsqrt.pop %v1847
    %v1850 = vrsqrt.pop %v1848
    %v1851 = vmul.f32 %v1843, %v1849
    %v1852 = vmul.f32 %v1844, %v1849
    %v1853 = vmul.f32 %v1845, %v1850
    %v1854 = vmul.f32 %v1846, %v1850
    %v1855 = vld [vmem:[#allocation7] sm:$0xff]
    %v1856 = vld [vmem:[#allocation7 + $0x8] sm:$0xff]
    %v1857 = vld [vmem:[#allocation7 + $0x10] sm:$0xff]
    %v1858 = vld [vmem:[#allocation7 + $0x18] sm:$0xff]
    %v1859 = vld [vmem:[#allocation7 + $0x20] sm:$0xff]
    %v1860 = vld [vmem:[#allocation7 + $0x28] sm:$0xff]
    %v1861 = vld [vmem:[#allocation7 + $0x30] sm:$0xff]
    %v1862 = vld [vmem:[#allocation7 + $0x38] sm:$0xff]
    %v1863 = vld [vmem:[#allocation7 + $0x40] sm:$0xff]
    %v1864 = vld [vmem:[#allocation7 + $0x48] sm:$0xff]
    %v1865 = vld [vmem:[#allocation7 + $0x50] sm:$0xff]
    %v1866 = vld [vmem:[#allocation7 + $0x58] sm:$0xff]
    %v1867 = vld [vmem:[#allocation7 + $0x60] sm:$0xff]
    %v1868 = vld [vmem:[#allocation7 + $0x68] sm:$0xff]
    %v1869 = vld [vmem:[#allocation7 + $0x70] sm:$0xff]
    %v1870 = vld [vmem:[#allocation7 + $0x78] sm:$0xff]
    %v1871 = vld [vmem:[#allocation7 + $0x80] sm:$0xff]
    %v1872 = vld [vmem:[#allocation7 + $0x88] sm:$0xff]
    %v1873 = vld [vmem:[#allocation7 + $0x90] sm:$0xff]
    %v1874 = vld [vmem:[#allocation7 + $0x98] sm:$0xff]
    %v1875 = vld [vmem:[#allocation7 + $0xa0] sm:$0xff]
    %v1876 = vld [vmem:[#allocation7 + $0xa8] sm:$0xff]
    %v1877 = vld [vmem:[#allocation7 + $0xb0] sm:$0xff]
    %v1878 = vld [vmem:[#allocation7 + $0xb8] sm:$0xff]
    %v1879 = vld [vmem:[#allocation7 + $0xc0] sm:$0xff]
    %v1880 = vld [vmem:[#allocation7 + $0xc8] sm:$0xff]
    %v1881 = vld [vmem:[#allocation7 + $0xd0] sm:$0xff]
    %v1882 = vld [vmem:[#allocation7 + $0xd8] sm:$0xff]
    %v1883 = vld [vmem:[#allocation7 + $0xe0] sm:$0xff]
    %v1884 = vld [vmem:[#allocation7 + $0xe8] sm:$0xff]
    %v1885 = vld [vmem:[#allocation7 + $0xf0] sm:$0xff]
    %v1886 = vld [vmem:[#allocation7 + $0xf8] sm:$0xff]
    %v1887 = vld [vmem:[%s4] sm:$0x1]
    %v1889 = vlaneseq
    %v1890 = vshrl.u32 %v1889, 7
    %v1891 = vsub.s32 0, %v1890
    %v1892 = vrot.slane %v1887, %v1891
    %1894 = vmatprep.subr.mxu0 0.0
    %1895 = vmatpush1.msra.mxu0 %v1870
    %1896 = vmatprep.subr.mxu0 0.0
    %1897 = vmatpush1.msra.mxu0 %v1869
    %1898 = vmatprep.subr.mxu0 0.0
    %1899 = vmatpush1.msra.mxu0 %v1868
    %1900 = vmatprep.subr.mxu0 0.0
    %1901 = vmatpush1.msra.mxu0 %v1867
    %1902 = vmatprep.subr.mxu0 0.0
    %1903 = vmatpush1.msra.mxu0 %v1866
    %1904 = vmatprep.subr.mxu0 0.0
    %1905 = vmatpush1.msra.mxu0 %v1865
    %1906 = vmatprep.subr.mxu0 0.0
    %1907 = vmatpush1.msra.mxu0 %v1864
    %1908 = vmatprep.subr.mxu0 0.0
    %1909 = vmatpush1.msra.mxu0 %v1863
    %1910 = vmatprep.subr.mxu0 0.0
    %1911 = vmatpush1.msra.mxu0 %v1862
    %1912 = vmatprep.subr.mxu0 0.0
    %1913 = vmatpush1.msra.mxu0 %v1861
    %1914 = vmatprep.subr.mxu0 0.0
    %1915 = vmatpush1.msra.mxu0 %v1860
    %1916 = vmatprep.subr.mxu0 0.0
    %1917 = vmatpush1.msra.mxu0 %v1859
    %1918 = vmatprep.subr.mxu0 0.0
    %1919 = vmatpush1.msra.mxu0 %v1858
    %1920 = vmatprep.subr.mxu0 0.0
    %1921 = vmatpush1.msra.mxu0 %v1857
    %1922 = vmatprep.subr.mxu0 0.0
    %1923 = vmatpush1.msra.mxu0 %v1856
    %1924 = vmatprep.subr.mxu0 0.0
    %1925 = vmatpush1.msra.mxu0 %v1855
    %1926 = vmatprep.subr.mxu0 0.0
    %1927 = vmatpush2.msra.mxu0 %v1886
    %1928 = vmatprep.subr.mxu0 0.0
    %1929 = vmatpush2.msra.mxu0 %v1885
    %1930 = vmatprep.subr.mxu0 0.0
    %1931 = vmatpush2.msra.mxu0 %v1884
    %1932 = vmatprep.subr.mxu0 0.0
    %1933 = vmatpush2.msra.mxu0 %v1883
    %1934 = vmatprep.subr.mxu0 0.0
    %1935 = vmatpush2.msra.mxu0 %v1882
    %1936 = vmatprep.subr.mxu0 0.0
    %1937 = vmatpush2.msra.mxu0 %v1881
    %1938 = vmatprep.subr.mxu0 0.0
    %1939 = vmatpush2.msra.mxu0 %v1880
    %1940 = vmatprep.subr.mxu0 0.0
    %1941 = vmatpush2.msra.mxu0 %v1879
    %1942 = vmatprep.subr.mxu0 0.0
    %1943 = vmatpush2.msra.mxu0 %v1878
    %1944 = vmatprep.subr.mxu0 0.0
    %1945 = vmatpush2.msra.mxu0 %v1877
    %1946 = vmatprep.subr.mxu0 0.0
    %1947 = vmatpush2.msra.mxu0 %v1876
    %1948 = vmatprep.subr.mxu0 0.0
    %1949 = vmatpush2.msra.mxu0 %v1875
    %1950 = vmatprep.subr.mxu0 0.0
    %1951 = vmatpush2.msra.mxu0 %v1874
    %1952 = vmatprep.subr.mxu0 0.0
    %1953 = vmatpush2.msra.mxu0 %v1873
    %1954 = vmatprep.subr.mxu0 0.0
    %1955 = vmatpush2.msra.mxu0 %v1872
    %1956 = vmatprep.subr.mxu0 0.0
    %1957 = vmatpush2.msra.mxu0 %v1871
    %1958 = vmatprep.mubr.f32.mxu0 %v1852
    %1959 = vmatmul.mubr.f32.gmra.mxu0 %v1851
    %v1960 = vpop.f32.mrf.mxu0
    %v1961 = vadd.f32 %v1892, %v1960
    %v1962 = vpop.f32.mrf.mxu0
    %1963 = vmatprep.mubr.f32.mxu0 %v1854
    %1964 = vmatmul.mubr.f32.gmra.mxu0 %v1853
    %v1965 = vpop.f32.mrf.mxu0
    %v1966 = vadd.f32 %v1892, %v1965
    %v1967 = vpop.f32.mrf.mxu0
    %1968 = vdwg.mxu0
    %vm1969 = vcmp.ge.f32.partialorder %v1961, 0.0
    %vm1970 = vcmp.ge.f32.partialorder %v1966, 0.0
    %v1971 = vmul.f32 %v1961, 0.01
    %v1972 = vmul.f32 %v1966, 0.01
    %v1973 = vsel %vm1969, %v1961, %v1971
    %v1974 = vsel %vm1970, %v1966, %v1972
    %v1975 = vpack.c.bf16 %v1974, %v1973
    %v1977 = vcombine.high %v1975, %v1975
    %v1979 = vunpack.c.l.s4 1966171168
    %v1980 = vunpack.c.0.s8 %v1979
    %v1981 = vlaneseq
    %v1982 = vshrl.u32 %v1981, 7
    %v1983 = vsub.s32 %v1980, %v1982
    %v1984 = vrot.slane %v1975, %v1983
    %v1986 = vunpack.c.l.s4 1966171168
    %v1987 = vunpack.c.0.s8 %v1986
    %v1988 = vlaneseq
    %v1989 = vshrl.u32 %v1988, 7
    %v1990 = vsub.s32 %v1987, %v1989
    %v1991 = vrot.slane %v1977, %v1990
    %v1992 = vcombine.high %v1984, %v1984
    %v1993 = vcombine.high %v1991, %v1991
    %v1995 = vunpack.c.l.s4 1966171168
    %v1996 = vunpack.c.0.s8 %v1995
    %v1997 = vlaneseq
    %v1998 = vshrl.u32 %v1997, 7
    %v1999 = vsub.s32 %v1996, %v1998
    %v2000 = vrot.slane %v1984, %v1999
    %v2002 = vunpack.c.l.s4 1966171168
    %v2003 = vunpack.c.0.s8 %v2002
    %v2004 = vlaneseq
    %v2005 = vshrl.u32 %v2004, 7
    %v2006 = vsub.s32 %v2003, %v2005
    %v2007 = vrot.slane %v1991, %v2006
    %v2009 = vunpack.c.l.s4 1966171168
    %v2010 = vunpack.c.0.s8 %v2009
    %v2011 = vlaneseq
    %v2012 = vshrl.u32 %v2011, 7
    %v2013 = vsub.s32 %v2010, %v2012
    %v2014 = vrot.slane %v1992, %v2013
    %v2016 = vunpack.c.l.s4 1966171168
    %v2017 = vunpack.c.0.s8 %v2016
    %v2018 = vlaneseq
    %v2019 = vshrl.u32 %v2018, 7
    %v2020 = vsub.s32 %v2017, %v2019
    %v2021 = vrot.slane %v1993, %v2020
    %v2022 = vcombine.high %v2000, %v2000
    %v2023 = vcombine.high %v2007, %v2007
    %v2024 = vcombine.high %v2014, %v2014
    %v2025 = vcombine.high %v2021, %v2021
    %2034 = vst [vmem:[#allocation8] sm:$0x1] %v2000
    %2035 = vst [vmem:[#allocation8 + $0x1] sm:$0x1] %v2014
    %2036 = vst [vmem:[#allocation8 + $0x2] sm:$0x1] %v2022
    %2037 = vst [vmem:[#allocation8 + $0x3] sm:$0x1] %v2024
    %2038 = vst [vmem:[#allocation8 + $0x4] sm:$0x1] %v2007
    %2039 = vst [vmem:[#allocation8 + $0x5] sm:$0x1] %v2021
    %2040 = vst [vmem:[#allocation8 + $0x6] sm:$0x1] %v2023
    %2041 = vst [vmem:[#allocation8 + $0x7] sm:$0x1] %v2025
    // Predicated region
    $region34: #{tpu_custom_call.1} parent=1 // pred_check
      _
    $region35: #{tpu_custom_call.1} parent=1 // pred_check_branch
      %2043 = sbr.rel (0) target = $region37
    $region36: #{tpu_custom_call.1} parent=1 // pred_region
      %s2045 = ssub.s32 128, 16
      %2046 = vsyncadd [#allocation4], %s2045
      %s2047 = sshll.u32 [#allocation8], 4
      %s2048 = int_to_ptr.vmem [resolvable:$true] %s2047
      %2053 = dma.vmem_to_hbm [thread:$0]  %s2048, 16, %s5, [#allocation4], 16, 16, 1
    $region37: #{tpu_custom_call.1} parent=1 // pred_fallthru
      _
    // Predicated region
    $region38: #{tpu_custom_call.1} parent=1 // pred_check
      _
    $region39: #{tpu_custom_call.1} parent=1 // pred_check_branch
      %2055 = sbr.rel (0) target = $region41
    $region40: #{tpu_custom_call.1} parent=1 // pred_region
      %2056 = dma.done [#allocation4], 128
    $region41: #{tpu_custom_call.1} parent=1 // pred_fallthru
      _
    %2057 = vsyncpa [#allocation3], 1
    %2058 = vsyncpa [#allocation6], 1
    %2059 = vsyncpa [#allocation4], 1

</llo_original>
